<compile_context>
chip_gen: v7x
topology: tpu7x:2x2x1
jax: 0.10.0
libtpu: 0.0.40
codegen_flags: <defaults>
</compile_context>

<pallas_src>
import functools

import jax
import jax.numpy as jnp
from jax.experimental import pallas as pl
from jax.experimental.pallas import tpu as pltpu

F = 128          # lane-padded feature width (input/hidden/output all pad to this)
SLAB_ROWS = 3 * F + 8   # W1p(128) + W2p(128) + W3p(128) + bias block(8) = 392


def _round_up(n, m):
    return ((n + m - 1) // m) * m


def _neural_arima_kernel(x_ref, p_ref, out_ref):
    """One (TB, 128) batch tile through the fused 3-layer MLP.

    p_ref is the packed parameter slab (392, 128):
      rows [  0:128) = W1 zero-padded to (128, 128)
      rows [128:256) = W2 zero-padded to (128, 128)
      rows [256:384) = W3 zero-padded to (128, 128)
      rows [384:392) = bias block: row 0 = b1, row 1 = b2, row 2 = b3 (rest 0)
    Zero padding is exact under ReLU, so padded lanes stay identically 0.
    """
    x = x_ref[...]                                   # (TB, 128)
    w1 = p_ref[0:F, :]                               # (128, 128), tile-aligned slices
    w2 = p_ref[F:2 * F, :]
    w3 = p_ref[2 * F:3 * F, :]
    bb = p_ref[3 * F:3 * F + 8, :]                   # (8, 128) bias block
    b1 = bb[0:1, :]
    b2 = bb[1:2, :]
    b3 = bb[2:3, :]

    h1 = jnp.dot(x, w1, preferred_element_type=jnp.float32)
    h1 = jnp.maximum(h1 + b1, 0.0)                   # (TB, 128)
    h2 = jnp.dot(h1, w2, preferred_element_type=jnp.float32)
    h2 = jnp.maximum(h2 + b2, 0.0)                   # (TB, 128)
    y = jnp.dot(h2, w3, preferred_element_type=jnp.float32) + b3   # (TB, 128)
    out_ref[...] = y.astype(out_ref.dtype)           # lane-dense (128-wide) store


def pack_params(w1, b1, w2, b2, w3, b3):
    """Pack all weights/biases into one lane-dense (392, 128) f32 slab."""
    def padw(w):
        return jnp.zeros((F, F), jnp.float32).at[: w.shape[0], : w.shape[1]].set(w)

    def padb(b):
        b = jnp.asarray(b, jnp.float32).reshape(1, -1)
        return jnp.zeros((1, F), jnp.float32).at[:, : b.shape[1]].set(b)

    bias_block = jnp.concatenate(
        [padb(b1), padb(b2), padb(b3), jnp.zeros((5, F), jnp.float32)], axis=0)
    return jnp.concatenate([padw(w1), padw(w2), padw(w3), bias_block], axis=0)


@functools.partial(jax.jit, static_argnames=("block_rows",))
def neural_arima_forward(x, w1, b1, w2, b2, w3, b3, *, block_rows=512):
    """Fused batched forward. x: (B, input_size) f32 -> (B, output_size) f32."""
    B, in_size = x.shape
    hid = w1.shape[1]
    out_size = w3.shape[1]
    assert in_size <= F and hid <= F and out_size <= F, "feature dims must be <= 128"

    params = pack_params(w1, b1, w2, b2, w3, b3)     # (392, 128), one DMA

    # Batch tile: multiple of 8 sublanes, capped at block_rows.
    tb = min(block_rows, _round_up(B, 8))
    b_pad = _round_up(B, tb)

    # Lane-pad x to 128 features, row-pad batch to a multiple of the tile.
    xp = jnp.zeros((b_pad, F), jnp.float32).at[:B, :in_size].set(x)

    out = pl.pallas_call(
        _neural_arima_kernel,
        out_shape=jax.ShapeDtypeStruct((b_pad, F), jnp.float32),
        grid_spec=pltpu.PrefetchScalarGridSpec(
            num_scalar_prefetch=0,
            grid=(b_pad // tb,),
            in_specs=[
                pl.BlockSpec((tb, F), lambda i: (i, 0)),          # x tile
                pl.BlockSpec((SLAB_ROWS, F), lambda i: (0, 0)),   # params (resident)
            ],
            out_specs=pl.BlockSpec((tb, F), lambda i: (i, 0)),
        ),
        compiler_params=pltpu.CompilerParams(
            dimension_semantics=("parallel",)),
    )(xp, params)

    return out[:B, :out_size]


def init_params(key, input_size, hidden_size, output_size):
    """PyTorch-nn.Linear-style init, U[-1/sqrt(fan_in), 1/sqrt(fan_in)].

    Weights are stored transposed relative to nn.Linear: (in, out).
    """
    ks = jax.random.split(key, 6)

    def lin(kw, kb, fan_in, fan_out):
        bound = 1.0 / jnp.sqrt(jnp.asarray(fan_in, jnp.float32))
        w = jax.random.uniform(kw, (fan_in, fan_out), jnp.float32, -bound, bound)
        b = jax.random.uniform(kb, (1, fan_out), jnp.float32, -bound, bound)
        return w, b

    w1, b1 = lin(ks[0], ks[1], input_size, hidden_size)
    w2, b2 = lin(ks[2], ks[3], hidden_size, hidden_size)
    w3, b3 = lin(ks[4], ks[5], hidden_size, output_size)
    return w1, b1, w2, b2, w3, b3


# TODO(synk): fit()/predict() (Adam training loop with MA-error loss) is
# host-side training logic, not part of the forward kernel; only forward()
# is implemented here.

if __name__ == "__main__":
    # Shapes implied by the module: p=12 lag features -> input_size=12,
    # hidden_size=32, output_size=1. Batch of 1024 windows exercises the
    # batched grid (tb=512 -> 2 grid steps).
    input_size, hidden_size, output_size = 12, 32, 1
    batch = 1024

    key = jax.random.PRNGKey(0)
    k_params, k_x = jax.random.split(key)

    w1, b1, w2, b2, w3, b3 = init_params(k_params, input_size, hidden_size,
                                         output_size)
    x = jax.random.normal(k_x, (batch, input_size), jnp.float32)

    out = neural_arima_forward(x, w1, b1, w2, b2, w3, b3)
    out = jax.block_until_ready(out)

    # Pure-JAX reference check of the fused kernel.
    ref = jnp.maximum(x @ w1 + b1, 0.0)
    ref = jnp.maximum(ref @ w2 + b2, 0.0)
    ref = ref @ w3 + b3
    assert out.shape == (batch, output_size)
    assert jnp.allclose(out, ref, atol=1e-5, rtol=1e-5)

    print("KERNEL_OK")
</pallas_src>

<mosaic_0001>
module attributes {stable_mosaic.version = 11 : i64} {
  func.func @_neural_arima_kernel(%arg0: i32, %arg1: memref<512x128xf32, #tpu.memory_space<vmem>>, %arg2: memref<392x128xf32, #tpu.memory_space<vmem>>, %arg3: memref<512x128xf32, #tpu.memory_space<vmem>>) attributes {dimension_semantics = [#tpu.dimension_semantics<parallel>], iteration_bounds = array<i64: 2>, scalar_prefetch = 0 : i64, scratch_operands = 0 : i64, tpu.core_type = #tpu.core_type<tc>, window_params = [{transform_indices = @transform_0, window_bounds = array<i64: 512, 128>}, {pipeline_mode = #tpu.pipeline_mode<synchronous>, transform_indices = @transform_1, window_bounds = array<i64: 392, 128>}, {transform_indices = @transform_2, window_bounds = array<i64: 512, 128>}]} {
    %c0 = arith.constant 0 : index
    %c0_0 = arith.constant 0 : index
    %0 = vector.load %arg1[%c0, %c0_0] : memref<512x128xf32, #tpu.memory_space<vmem>>, vector<512x128xf32>
    %c0_1 = arith.constant 0 : index
    %c0_2 = arith.constant 0 : index
    %1 = vector.load %arg2[%c0_1, %c0_2] : memref<392x128xf32, #tpu.memory_space<vmem>>, vector<128x128xf32>
    %c128 = arith.constant 128 : index
    %c0_3 = arith.constant 0 : index
    %2 = vector.load %arg2[%c128, %c0_3] : memref<392x128xf32, #tpu.memory_space<vmem>>, vector<128x128xf32>
    %c256 = arith.constant 256 : index
    %c0_4 = arith.constant 0 : index
    %3 = vector.load %arg2[%c256, %c0_4] : memref<392x128xf32, #tpu.memory_space<vmem>>, vector<128x128xf32>
    %c384 = arith.constant 384 : index
    %c0_5 = arith.constant 0 : index
    %4 = vector.load %arg2[%c384, %c0_5] : memref<392x128xf32, #tpu.memory_space<vmem>>, vector<8x128xf32>
    %5 = vector.extract_strided_slice %4 {offsets = [0, 0], sizes = [1, 128], strides = [1, 1]} : vector<8x128xf32> to vector<1x128xf32>
    %6 = vector.extract_strided_slice %4 {offsets = [1, 0], sizes = [1, 128], strides = [1, 1]} : vector<8x128xf32> to vector<1x128xf32>
    %7 = vector.extract_strided_slice %4 {offsets = [2, 0], sizes = [1, 128], strides = [1, 1]} : vector<8x128xf32> to vector<1x128xf32>
    %cst = arith.constant dense<0.000000e+00> : vector<512x128xf32>
    %8 = tpu.matmul %0, %1, %cst {dimension_numbers = #tpu.dot_dimension_numbers<[1], [0], [0], [1], [0, 0, 1, 1], [], []>} : vector<512x128xf32>, vector<128x128xf32>, vector<512x128xf32> -> vector<512x128xf32>
    %9 = vector.broadcast %5 : vector<1x128xf32> to vector<512x128xf32>
    %10 = arith.addf %8, %9 : vector<512x128xf32>
    %cst_6 = arith.constant 0.000000e+00 : f32
    %11 = vector.broadcast %cst_6 : f32 to vector<512x128xf32>
    %12 = arith.maximumf %10, %11 : vector<512x128xf32>
    %cst_7 = arith.constant dense<0.000000e+00> : vector<512x128xf32>
    %13 = tpu.matmul %12, %2, %cst_7 {dimension_numbers = #tpu.dot_dimension_numbers<[1], [0], [0], [1], [0, 0, 1, 1], [], []>} : vector<512x128xf32>, vector<128x128xf32>, vector<512x128xf32> -> vector<512x128xf32>
    %14 = vector.broadcast %6 : vector<1x128xf32> to vector<512x128xf32>
    %15 = arith.addf %13, %14 : vector<512x128xf32>
    %cst_8 = arith.constant 0.000000e+00 : f32
    %16 = vector.broadcast %cst_8 : f32 to vector<512x128xf32>
    %17 = arith.maximumf %15, %16 : vector<512x128xf32>
    %cst_9 = arith.constant dense<0.000000e+00> : vector<512x128xf32>
    %18 = tpu.matmul %17, %3, %cst_9 {dimension_numbers = #tpu.dot_dimension_numbers<[1], [0], [0], [1], [0, 0, 1, 1], [], []>} : vector<512x128xf32>, vector<128x128xf32>, vector<512x128xf32> -> vector<512x128xf32>
    %19 = vector.broadcast %7 : vector<1x128xf32> to vector<512x128xf32>
    %20 = arith.addf %18, %19 : vector<512x128xf32>
    %c0_10 = arith.constant 0 : index
    %c0_11 = arith.constant 0 : index
    %21 = vector.load %arg3[%c0_10, %c0_11] : memref<512x128xf32, #tpu.memory_space<vmem>>, vector<512x128xf32>
    tpu.vector_store %arg3[%c0_10, %c0_11], %20 {strides = array<i32>} : memref<512x128xf32, #tpu.memory_space<vmem>>, vector<512x128xf32>,
    return
  }
  func.func @transform_0(%arg0: i32) -> (i32, i32) {
    %c0_i32 = arith.constant 0 : i32
    %c0_i32_0 = arith.constant 0 : i32
    return %arg0, %c0_i32 : i32, i32
  }
  func.func @transform_1(%arg0: i32) -> (i32, i32) {
    %c0_i32 = arith.constant 0 : i32
    %c0_i32_0 = arith.constant 0 : i32
    %c0_i32_1 = arith.constant 0 : i32
    return %c0_i32, %c0_i32_0 : i32, i32
  }
  func.func @transform_2(%arg0: i32) -> (i32, i32) {
    %c0_i32 = arith.constant 0 : i32
    %c0_i32_0 = arith.constant 0 : i32
    return %arg0, %c0_i32 : i32, i32
  }
}

</mosaic_0001>

<llo_original>
// kernel: neural_arima_forward.1
$region0: #{neural_arima_forward.1}
  #allocation0 [shape = 'u32[]', space=smem, size = 0x4, offset = 0x4, fixed_abs, tag = 'smem constant byte address 0x4 - core index']
  #allocation1 [shape = 'u32[144,128]{1,0:T(1,128)}', space=vmem, size = 0x12000, scoped, tag = 'internal scratch']
  %s0 = inlined_call_operand.vmem [shape: f32[1024,128], index: 0, kind: input, shape index: {}]
  %s1 = inlined_call_operand.vmem [shape: f32[392,128], index: 1, kind: input, shape index: {}]
  %s2 = inlined_call_operand.vmem [shape: f32[1024,128], index: 2, kind: output, shape index: {}]
  %s3 = sld [smem:[#allocation0]]
  $region41: #{neural_arima_forward.1} parent=0
    _
  %s5 = ssub.s32 1, %s3
  %s6 = scalar_select 0, %s5, %s3
  loop: start=0, step=1, limit=4
  $region2: #{neural_arima_forward.1} parent=0 // loop_pre_header
    _
  $region3: #{neural_arima_forward.1} parent=0 // loop_header
    %s8 = sphi 0, %s12
    %p9 = scmp.ge.s32.totalorder %s8, 4
    %s18 = sphi 0, %s20
    %s21 = sphi 0, %s18
    %s22 = sphi 0, %s21
    %s38 = sphi 0, %s22
    %s42 = sphi 0, %s42
    %s44 = sphi 0, %s42
    %s45 = sphi 0, %s44
    %s59 = sphi 0, %s45
    %s65 = sphi 0, %s67
    %s68 = sphi 0, %s65
    %s69 = sphi 0, %s68
    %s85 = sphi 0, %s69
  $region4: #{neural_arima_forward.1} parent=0 // loop_header_branch
    %11 = sbr.rel (%p9) target = $region8
  $region5: #{neural_arima_forward.1} parent=0 // loop_body
    %s13 = ssub.s32 %s8, 1
    %s14 = ssub.s32 %s8, 2
    %s15 = sadd.s32 %s8, 1
    %s16 = ssub.s32 %s8, %s15
    %p17 = scmp.eq.s32.totalorder %s16, 0
    %s19 = sadd.s32 %s18, 1
    %s20 = scalar_select %p17, %s18, %s19
    %p23 = pneg %p17
    %p24 = scmp.eq.s32.totalorder %s8, 1
    %p25 = por %p23, %p24
    %p26 = scmp.ne.s32.totalorder %s18, %s21
    %p27 = scmp.eq.s32.totalorder %s8, 0
    %p28 = por %p26, %p27
    %p29 = scmp.ne.s32.totalorder %s18, %s21
    %p30 = scmp.eq.s32.totalorder %s13, 1
    %p31 = por %p29, %p30
    %p32 = scmp.ne.s32.totalorder %s21, %s22
    %p33 = scmp.eq.s32.totalorder %s13, 0
    %p34 = por %p32, %p33
    %p35 = scmp.ne.s32.totalorder %s21, %s22
    %p36 = scmp.eq.s32.totalorder %s14, 1
    %p37 = por %p35, %p36
    %p39 = scmp.ne.s32.totalorder %s22, %s38
    %p40 = scmp.eq.s32.totalorder %s14, 0
    %p41 = por %p39, %p40
    %s43 = sadd.s32 %s42, 1
    %p46 = scmp.eq.s32.totalorder %s8, 1
    %p47 = scmp.ne.s32.totalorder %s42, %s44
    %p48 = scmp.eq.s32.totalorder %s8, 0
    %p49 = por %p47, %p48
    %p50 = scmp.ne.s32.totalorder %s42, %s44
    %p51 = scmp.eq.s32.totalorder %s13, 1
    %p52 = por %p50, %p51
    %p53 = scmp.ne.s32.totalorder %s44, %s45
    %p54 = scmp.eq.s32.totalorder %s13, 0
    %p55 = por %p53, %p54
    %p56 = scmp.ne.s32.totalorder %s44, %s45
    %p57 = scmp.eq.s32.totalorder %s14, 1
    %p58 = por %p56, %p57
    %p60 = scmp.ne.s32.totalorder %s45, %s59
    %p61 = scmp.eq.s32.totalorder %s14, 0
    %p62 = por %p60, %p61
    %s63 = ssub.s32 %s8, %s15
    %p64 = scmp.eq.s32.totalorder %s63, 0
    %s66 = sadd.s32 %s65, 1
    %s67 = scalar_select %p64, %s65, %s66
    %p70 = pneg %p64
    %p71 = scmp.eq.s32.totalorder %s8, 1
    %p72 = por %p70, %p71
    %p73 = scmp.ne.s32.totalorder %s65, %s68
    %p74 = scmp.eq.s32.totalorder %s8, 0
    %p75 = por %p73, %p74
    %p76 = scmp.ne.s32.totalorder %s65, %s68
    %p77 = scmp.eq.s32.totalorder %s13, 1
    %p78 = por %p76, %p77
    %p79 = scmp.ne.s32.totalorder %s68, %s69
    %p80 = scmp.eq.s32.totalorder %s13, 0
    %p81 = por %p79, %p80
    %p82 = scmp.ne.s32.totalorder %s68, %s69
    %p83 = scmp.eq.s32.totalorder %s14, 1
    %p84 = por %p82, %p83
    %p86 = scmp.ne.s32.totalorder %s69, %s85
    %p87 = scmp.eq.s32.totalorder %s14, 0
    %p88 = por %p86, %p87
    %p89 = scmp.le.s32.totalorder 1, %s8
    %p90 = scmp.lt.s32.totalorder %s8, 3
    %p91 = pnand %p89, %p90
    %p92 = pneg %p91
    // Predicated region
    $region9: #{neural_arima_forward.1} parent=5 // pred_check
      _
    $region10: #{neural_arima_forward.1} parent=5 // pred_check_branch
      %94 = sbr.rel (%p91) target = $region12
    $region11: #{neural_arima_forward.1} parent=5 // pred_region
      %s95 = ssub.s32 %s8, 1
      // Predicated region
      $region13: #{neural_arima_forward.1} parent=11 // pred_check
        %p96 = pneg %p55
      $region14: #{neural_arima_forward.1} parent=11 // pred_check_branch
        %98 = sbr.rel (%p96) target = $region16
      $region15: #{neural_arima_forward.1} parent=11 // pred_region
        _
      $region16: #{neural_arima_forward.1} parent=11 // pred_fallthru
        _
    $region12: #{neural_arima_forward.1} parent=5 // pred_fallthru
      _
    %p99 = scmp.lt.s32.totalorder %s8, 2
    // Predicated region
    $region17: #{neural_arima_forward.1} parent=5 // pred_check
      %p100 = pneg %p99
    $region18: #{neural_arima_forward.1} parent=5 // pred_check_branch
      %102 = sbr.rel (%p100) target = $region20
    $region19: #{neural_arima_forward.1} parent=5 // pred_region
      // Predicated region
      $region21: #{neural_arima_forward.1} parent=19 // pred_check
        %p103 = pneg %p28
      $region22: #{neural_arima_forward.1} parent=19 // pred_check_branch
        %105 = sbr.rel (%p103) target = $region24
      $region23: #{neural_arima_forward.1} parent=19 // pred_region
        %s106 = smul.u32 64, %s8
        %p107 = scmp.lt.s32.totalorder %s106, 127
        %s108 = scalar_select %p107, %s106, 127
        %s109 = smul.addr %s108, 8
        %s110 = scalar_lea.vmem %s0, %s109
        %s111 = smul.u32 64, %s8
      $region24: #{neural_arima_forward.1} parent=19 // pred_fallthru
        _
    $region20: #{neural_arima_forward.1} parent=5 // pred_fallthru
      _
    %p112 = scmp.le.s32.totalorder 1, %s8
    %p113 = scmp.lt.s32.totalorder %s8, 3
    %p114 = pnand %p112, %p113
    %p115 = pneg %p114
    // Predicated region
    $region25: #{neural_arima_forward.1} parent=5 // pred_check
      _
    $region26: #{neural_arima_forward.1} parent=5 // pred_check_branch
      %117 = sbr.rel (%p114) target = $region28
    $region27: #{neural_arima_forward.1} parent=5 // pred_region
      %s118 = ssub.s32 %s8, 1
      %s119 = smul.u32 64, %s13
      %p120 = scmp.lt.s32.totalorder %s119, 127
      %s121 = scalar_select %p120, %s119, 127
      %s122 = smul.addr %s121, 8
      %s123 = scalar_lea.vmem %s0, %s122
      %p124 = pneg %p34
      %p125 = pneg %p31
      %p126 = pneg %p55
      %p127 = pneg %p52
      %p128 = pneg %p81
      %p129 = pneg %p78
      %s130 = smul.u32 64, %s13
      %p131 = scmp.lt.s32.totalorder %s130, 127
      %s132 = scalar_select %p131, %s130, 127
      %s133 = smul.addr %s132, 8
      %s134 = scalar_lea.vmem %s2, %s133
      %s135 = smul.u32 64, %s13
      %p136 = scmp.lt.s32.totalorder %s135, 127
      %s137 = scalar_select %p136, %s135, 127
      %s138 = smul.addr %s137, 8
      %s139 = scalar_lea.vmem %s0, %s138
      %s140 = smul.u32 64, %s13
      %s141 = smul.u32 64, %s13
      %p142 = scmp.lt.s32.totalorder %s141, 127
      %s143 = scalar_select %p142, %s141, 127
      %s144 = smul.addr %s143, 8
      %s145 = scalar_lea.vmem %s2, %s144
      %s146 = smul.u32 64, %s13
      %v147 = vld [vmem:[%s139] sm:$0xff]
      %v148 = vld [vmem:[%s139 + $0x8] sm:$0xff]
      %v149 = vld [vmem:[%s139 + $0x10] sm:$0xff]
      %v150 = vld [vmem:[%s139 + $0x18] sm:$0xff]
      %v151 = vld [vmem:[%s139 + $0x20] sm:$0xff]
      %v152 = vld [vmem:[%s139 + $0x28] sm:$0xff]
      %v153 = vld [vmem:[%s139 + $0x30] sm:$0xff]
      %v154 = vld [vmem:[%s139 + $0x38] sm:$0xff]
      %v155 = vld [vmem:[%s139 + $0x40] sm:$0xff]
      %v156 = vld [vmem:[%s139 + $0x48] sm:$0xff]
      %v157 = vld [vmem:[%s139 + $0x50] sm:$0xff]
      %v158 = vld [vmem:[%s139 + $0x58] sm:$0xff]
      %v159 = vld [vmem:[%s139 + $0x60] sm:$0xff]
      %v160 = vld [vmem:[%s139 + $0x68] sm:$0xff]
      %v161 = vld [vmem:[%s139 + $0x70] sm:$0xff]
      %v162 = vld [vmem:[%s139 + $0x78] sm:$0xff]
      %v163 = vld [vmem:[%s139 + $0x80] sm:$0xff]
      %v164 = vld [vmem:[%s139 + $0x88] sm:$0xff]
      %v165 = vld [vmem:[%s139 + $0x90] sm:$0xff]
      %v166 = vld [vmem:[%s139 + $0x98] sm:$0xff]
      %v167 = vld [vmem:[%s139 + $0xa0] sm:$0xff]
      %v168 = vld [vmem:[%s139 + $0xa8] sm:$0xff]
      %v169 = vld [vmem:[%s139 + $0xb0] sm:$0xff]
      %v170 = vld [vmem:[%s139 + $0xb8] sm:$0xff]
      %v171 = vld [vmem:[%s139 + $0xc0] sm:$0xff]
      %v172 = vld [vmem:[%s139 + $0xc8] sm:$0xff]
      %v173 = vld [vmem:[%s139 + $0xd0] sm:$0xff]
      %v174 = vld [vmem:[%s139 + $0xd8] sm:$0xff]
      %v175 = vld [vmem:[%s139 + $0xe0] sm:$0xff]
      %v176 = vld [vmem:[%s139 + $0xe8] sm:$0xff]
      %v177 = vld [vmem:[%s139 + $0xf0] sm:$0xff]
      %v178 = vld [vmem:[%s139 + $0xf8] sm:$0xff]
      %v179 = vld [vmem:[%s139 + $0x100] sm:$0xff]
      %v180 = vld [vmem:[%s139 + $0x108] sm:$0xff]
      %v181 = vld [vmem:[%s139 + $0x110] sm:$0xff]
      %v182 = vld [vmem:[%s139 + $0x118] sm:$0xff]
      %v183 = vld [vmem:[%s139 + $0x120] sm:$0xff]
      %v184 = vld [vmem:[%s139 + $0x128] sm:$0xff]
      %v185 = vld [vmem:[%s139 + $0x130] sm:$0xff]
      %v186 = vld [vmem:[%s139 + $0x138] sm:$0xff]
      %v187 = vld [vmem:[%s139 + $0x140] sm:$0xff]
      %v188 = vld [vmem:[%s139 + $0x148] sm:$0xff]
      %v189 = vld [vmem:[%s139 + $0x150] sm:$0xff]
      %v190 = vld [vmem:[%s139 + $0x158] sm:$0xff]
      %v191 = vld [vmem:[%s139 + $0x160] sm:$0xff]
      %v192 = vld [vmem:[%s139 + $0x168] sm:$0xff]
      %v193 = vld [vmem:[%s139 + $0x170] sm:$0xff]
      %v194 = vld [vmem:[%s139 + $0x178] sm:$0xff]
      %v195 = vld [vmem:[%s139 + $0x180] sm:$0xff]
      %v196 = vld [vmem:[%s139 + $0x188] sm:$0xff]
      %v197 = vld [vmem:[%s139 + $0x190] sm:$0xff]
      %v198 = vld [vmem:[%s139 + $0x198] sm:$0xff]
      %v199 = vld [vmem:[%s139 + $0x1a0] sm:$0xff]
      %v200 = vld [vmem:[%s139 + $0x1a8] sm:$0xff]
      %v201 = vld [vmem:[%s139 + $0x1b0] sm:$0xff]
      %v202 = vld [vmem:[%s139 + $0x1b8] sm:$0xff]
      %v203 = vld [vmem:[%s139 + $0x1c0] sm:$0xff]
      %v204 = vld [vmem:[%s139 + $0x1c8] sm:$0xff]
      %v205 = vld [vmem:[%s139 + $0x1d0] sm:$0xff]
      %v206 = vld [vmem:[%s139 + $0x1d8] sm:$0xff]
      %v207 = vld [vmem:[%s139 + $0x1e0] sm:$0xff]
      %v208 = vld [vmem:[%s139 + $0x1e8] sm:$0xff]
      %v209 = vld [vmem:[%s139 + $0x1f0] sm:$0xff]
      %v210 = vld [vmem:[%s139 + $0x1f8] sm:$0xff]
      %v211 = vld [vmem:[%s1] sm:$0xff]
      %v212 = vld [vmem:[%s1 + $0x8] sm:$0xff]
      %v213 = vld [vmem:[%s1 + $0x10] sm:$0xff]
      %v214 = vld [vmem:[%s1 + $0x18] sm:$0xff]
      %v215 = vld [vmem:[%s1 + $0x20] sm:$0xff]
      %v216 = vld [vmem:[%s1 + $0x28] sm:$0xff]
      %v217 = vld [vmem:[%s1 + $0x30] sm:$0xff]
      %v218 = vld [vmem:[%s1 + $0x38] sm:$0xff]
      %v219 = vld [vmem:[%s1 + $0x40] sm:$0xff]
      %v220 = vld [vmem:[%s1 + $0x48] sm:$0xff]
      %v221 = vld [vmem:[%s1 + $0x50] sm:$0xff]
      %v222 = vld [vmem:[%s1 + $0x58] sm:$0xff]
      %v223 = vld [vmem:[%s1 + $0x60] sm:$0xff]
      %v224 = vld [vmem:[%s1 + $0x68] sm:$0xff]
      %v225 = vld [vmem:[%s1 + $0x70] sm:$0xff]
      %v226 = vld [vmem:[%s1 + $0x78] sm:$0xff]
      %v227 = vld [vmem:[%s1 + $0x80] sm:$0xff]
      %v228 = vld [vmem:[%s1 + $0x88] sm:$0xff]
      %v229 = vld [vmem:[%s1 + $0x90] sm:$0xff]
      %v230 = vld [vmem:[%s1 + $0x98] sm:$0xff]
      %v231 = vld [vmem:[%s1 + $0xa0] sm:$0xff]
      %v232 = vld [vmem:[%s1 + $0xa8] sm:$0xff]
      %v233 = vld [vmem:[%s1 + $0xb0] sm:$0xff]
      %v234 = vld [vmem:[%s1 + $0xb8] sm:$0xff]
      %v235 = vld [vmem:[%s1 + $0xc0] sm:$0xff]
      %v236 = vld [vmem:[%s1 + $0xc8] sm:$0xff]
      %v237 = vld [vmem:[%s1 + $0xd0] sm:$0xff]
      %v238 = vld [vmem:[%s1 + $0xd8] sm:$0xff]
      %v239 = vld [vmem:[%s1 + $0xe0] sm:$0xff]
      %v240 = vld [vmem:[%s1 + $0xe8] sm:$0xff]
      %v241 = vld [vmem:[%s1 + $0xf0] sm:$0xff]
      %v242 = vld [vmem:[%s1 + $0xf8] sm:$0xff]
      %v243 = vld [vmem:[%s1 + $0x100] sm:$0xff]
      %v244 = vld [vmem:[%s1 + $0x108] sm:$0xff]
      %v245 = vld [vmem:[%s1 + $0x110] sm:$0xff]
      %v246 = vld [vmem:[%s1 + $0x118] sm:$0xff]
      %v247 = vld [vmem:[%s1 + $0x120] sm:$0xff]
      %v248 = vld [vmem:[%s1 + $0x128] sm:$0xff]
      %v249 = vld [vmem:[%s1 + $0x130] sm:$0xff]
      %v250 = vld [vmem:[%s1 + $0x138] sm:$0xff]
      %v251 = vld [vmem:[%s1 + $0x140] sm:$0xff]
      %v252 = vld [vmem:[%s1 + $0x148] sm:$0xff]
      %v253 = vld [vmem:[%s1 + $0x150] sm:$0xff]
      %v254 = vld [vmem:[%s1 + $0x158] sm:$0xff]
      %v255 = vld [vmem:[%s1 + $0x160] sm:$0xff]
      %v256 = vld [vmem:[%s1 + $0x168] sm:$0xff]
      %v257 = vld [vmem:[%s1 + $0x170] sm:$0xff]
      %v258 = vld [vmem:[%s1 + $0x178] sm:$0xff]
      %v259 = vld [vmem:[%s1 + $0x180] sm:$0xff]
      %v260 = vlaneseq
      %v261 = vshrl.u32 %v260, 7
      %v262 = vsub.s32 0, %v261
      %v263 = vrot.slane %v259, %v262
      %264 = vmatprep.subr.mxu0 0.0
      %265 = vmatpush1.msra.mxu0 %v211
      %266 = vmatprep.subr.mxu0 0.0
      %267 = vmatpush1.msra.mxu0 %v212
      %268 = vmatprep.subr.mxu0 0.0
      %269 = vmatpush1.msra.mxu0 %v213
      %270 = vmatprep.subr.mxu0 0.0
      %271 = vmatpush1.msra.mxu0 %v214
      %272 = vmatprep.subr.mxu0 0.0
      %273 = vmatpush1.msra.mxu0 %v215
      %274 = vmatprep.subr.mxu0 0.0
      %275 = vmatpush1.msra.mxu0 %v216
      %276 = vmatprep.subr.mxu0 0.0
      %277 = vmatpush1.msra.mxu0 %v217
      %278 = vmatprep.subr.mxu0 0.0
      %279 = vmatpush1.msra.mxu0 %v218
      %280 = vmatprep.subr.mxu0 0.0
      %281 = vmatpush1.msra.mxu0 %v219
      %282 = vmatprep.subr.mxu0 0.0
      %283 = vmatpush1.msra.mxu0 %v220
      %284 = vmatprep.subr.mxu0 0.0
      %285 = vmatpush1.msra.mxu0 %v221
      %286 = vmatprep.subr.mxu0 0.0
      %287 = vmatpush1.msra.mxu0 %v222
      %288 = vmatprep.subr.mxu0 0.0
      %289 = vmatpush1.msra.mxu0 %v223
      %290 = vmatprep.subr.mxu0 0.0
      %291 = vmatpush1.msra.mxu0 %v224
      %292 = vmatprep.subr.mxu0 0.0
      %293 = vmatpush1.msra.mxu0 %v225
      %294 = vmatprep.subr.mxu0 0.0
      %295 = vmatpush1.msra.mxu0 %v226
      %296 = vmatprep.subr.mxu0 0.0
      %297 = vmatpush1.msra.mxu0 0.0
      %298 = vmatprep.subr.mxu0 0.0
      %299 = vmatpush1.msra.mxu0 0.0
      %300 = vmatprep.subr.mxu0 0.0
      %301 = vmatpush1.msra.mxu0 0.0
      %302 = vmatprep.subr.mxu0 0.0
      %303 = vmatpush1.msra.mxu0 0.0
      %304 = vmatprep.subr.mxu0 0.0
      %305 = vmatpush1.msra.mxu0 0.0
      %306 = vmatprep.subr.mxu0 0.0
      %307 = vmatpush1.msra.mxu0 0.0
      %308 = vmatprep.subr.mxu0 0.0
      %309 = vmatpush1.msra.mxu0 0.0
      %310 = vmatprep.subr.mxu0 0.0
      %311 = vmatpush1.msra.mxu0 0.0
      %312 = vmatprep.subr.mxu0 0.0
      %313 = vmatpush1.msra.mxu0 0.0
      %314 = vmatprep.subr.mxu0 0.0
      %315 = vmatpush1.msra.mxu0 0.0
      %316 = vmatprep.subr.mxu0 0.0
      %317 = vmatpush1.msra.mxu0 0.0
      %318 = vmatprep.subr.mxu0 0.0
      %319 = vmatpush1.msra.mxu0 0.0
      %320 = vmatprep.subr.mxu0 0.0
      %321 = vmatpush1.msra.mxu0 0.0
      %322 = vmatprep.subr.mxu0 0.0
      %323 = vmatpush1.msra.mxu0 0.0
      %324 = vmatprep.subr.mxu0 0.0
      %325 = vmatpush1.msra.mxu0 0.0
      %326 = vmatprep.subr.mxu0 0.0
      %327 = vmatpush1.msra.mxu0 0.0
      %328 = vmatprep.mubr.f32.mxu0 0.0
      %329 = vmatmul.mubr.f32.gmra.mrb[0].mxu0 %v147
      %v330 = vpop.f32.mrb[0].mxu0
      %v331 = vadd.f32 %v263, %v330
      %v332 = vpop.f32.mrb[0].mxu0
      %333 = vmatprep.mubr.f32.mxu0 0.0
      %334 = vmatmul.mubr.f32.gmra.mrb[0].mxu0 %v148
      %v335 = vpop.f32.mrb[0].mxu0
      %v336 = vadd.f32 %v263, %v335
      %v337 = vpop.f32.mrb[0].mxu0
      %338 = vmatprep.mubr.f32.mxu0 0.0
      %339 = vmatmul.mubr.f32.gmra.mrb[0].mxu0 %v149
      %v340 = vpop.f32.mrb[0].mxu0
      %v341 = vadd.f32 %v263, %v340
      %v342 = vpop.f32.mrb[0].mxu0
      %343 = vmatprep.mubr.f32.mxu0 0.0
      %344 = vmatmul.mubr.f32.gmra.mrb[0].mxu0 %v150
      %v345 = vpop.f32.mrb[0].mxu0
      %v346 = vadd.f32 %v263, %v345
      %v347 = vpop.f32.mrb[0].mxu0
      %348 = vmatprep.mubr.f32.mxu0 0.0
      %349 = vmatmul.mubr.f32.gmra.mrb[0].mxu0 %v151
      %v350 = vpop.f32.mrb[0].mxu0
      %v351 = vadd.f32 %v263, %v350
      %v352 = vpop.f32.mrb[0].mxu0
      %353 = vmatprep.mubr.f32.mxu0 0.0
      %354 = vmatmul.mubr.f32.gmra.mrb[0].mxu0 %v152
      %v355 = vpop.f32.mrb[0].mxu0
      %v356 = vadd.f32 %v263, %v355
      %v357 = vpop.f32.mrb[0].mxu0
      %358 = vmatprep.mubr.f32.mxu0 0.0
      %359 = vmatmul.mubr.f32.gmra.mrb[0].mxu0 %v153
      %v360 = vpop.f32.mrb[0].mxu0
      %v361 = vadd.f32 %v263, %v360
      %v362 = vpop.f32.mrb[0].mxu0
      %363 = vmatprep.mubr.f32.mxu0 0.0
      %364 = vmatmul.mubr.f32.gmra.mrb[0].mxu0 %v154
      %v365 = vpop.f32.mrb[0].mxu0
      %v366 = vadd.f32 %v263, %v365
      %v367 = vpop.f32.mrb[0].mxu0
      %368 = vmatprep.mubr.f32.mxu0 0.0
      %369 = vmatmul.mubr.f32.gmra.mrb[0].mxu0 %v155
      %v370 = vpop.f32.mrb[0].mxu0
      %v371 = vadd.f32 %v263, %v370
      %v372 = vpop.f32.mrb[0].mxu0
      %373 = vmatprep.mubr.f32.mxu0 0.0
      %374 = vmatmul.mubr.f32.gmra.mrb[0].mxu0 %v156
      %v375 = vpop.f32.mrb[0].mxu0
      %v376 = vadd.f32 %v263, %v375
      %v377 = vpop.f32.mrb[0].mxu0
      %378 = vmatprep.mubr.f32.mxu0 0.0
      %379 = vmatmul.mubr.f32.gmra.mrb[0].mxu0 %v157
      %v380 = vpop.f32.mrb[0].mxu0
      %v381 = vadd.f32 %v263, %v380
      %v382 = vpop.f32.mrb[0].mxu0
      %383 = vmatprep.mubr.f32.mxu0 0.0
      %384 = vmatmul.mubr.f32.gmra.mrb[0].mxu0 %v158
      %v385 = vpop.f32.mrb[0].mxu0
      %v386 = vadd.f32 %v263, %v385
      %v387 = vpop.f32.mrb[0].mxu0
      %388 = vmatprep.mubr.f32.mxu0 0.0
      %389 = vmatmul.mubr.f32.gmra.mrb[0].mxu0 %v159
      %v390 = vpop.f32.mrb[0].mxu0
      %v391 = vadd.f32 %v263, %v390
      %v392 = vpop.f32.mrb[0].mxu0
      %393 = vmatprep.mubr.f32.mxu0 0.0
      %394 = vmatmul.mubr.f32.gmra.mrb[0].mxu0 %v160
      %v395 = vpop.f32.mrb[0].mxu0
      %v396 = vadd.f32 %v263, %v395
      %v397 = vpop.f32.mrb[0].mxu0
      %398 = vmatprep.mubr.f32.mxu0 0.0
      %399 = vmatmul.mubr.f32.gmra.mrb[0].mxu0 %v161
      %v400 = vpop.f32.mrb[0].mxu0
      %v401 = vadd.f32 %v263, %v400
      %v402 = vpop.f32.mrb[0].mxu0
      %403 = vmatprep.mubr.f32.mxu0 0.0
      %404 = vmatmul.mubr.f32.gmra.mrb[0].mxu0 %v162
      %v405 = vpop.f32.mrb[0].mxu0
      %v406 = vadd.f32 %v263, %v405
      %v407 = vpop.f32.mrb[0].mxu0
      %408 = vmatprep.mubr.f32.mxu0 0.0
      %409 = vmatmul.mubr.f32.gmra.mrb[0].mxu0 %v163
      %v410 = vpop.f32.mrb[0].mxu0
      %v411 = vadd.f32 %v263, %v410
      %v412 = vpop.f32.mrb[0].mxu0
      %413 = vmatprep.mubr.f32.mxu0 0.0
      %414 = vmatmul.mubr.f32.gmra.mrb[0].mxu0 %v164
      %v415 = vpop.f32.mrb[0].mxu0
      %v416 = vadd.f32 %v263, %v415
      %v417 = vpop.f32.mrb[0].mxu0
      %418 = vmatprep.mubr.f32.mxu0 0.0
      %419 = vmatmul.mubr.f32.gmra.mrb[0].mxu0 %v165
      %v420 = vpop.f32.mrb[0].mxu0
      %v421 = vadd.f32 %v263, %v420
      %v422 = vpop.f32.mrb[0].mxu0
      %423 = vmatprep.mubr.f32.mxu0 0.0
      %424 = vmatmul.mubr.f32.gmra.mrb[0].mxu0 %v166
      %v425 = vpop.f32.mrb[0].mxu0
      %v426 = vadd.f32 %v263, %v425
      %v427 = vpop.f32.mrb[0].mxu0
      %428 = vmatprep.mubr.f32.mxu0 0.0
      %429 = vmatmul.mubr.f32.gmra.mrb[0].mxu0 %v167
      %v430 = vpop.f32.mrb[0].mxu0
      %v431 = vadd.f32 %v263, %v430
      %v432 = vpop.f32.mrb[0].mxu0
      %433 = vmatprep.mubr.f32.mxu0 0.0
      %434 = vmatmul.mubr.f32.gmra.mrb[0].mxu0 %v168
      %v435 = vpop.f32.mrb[0].mxu0
      %v436 = vadd.f32 %v263, %v435
      %v437 = vpop.f32.mrb[0].mxu0
      %438 = vmatprep.mubr.f32.mxu0 0.0
      %439 = vmatmul.mubr.f32.gmra.mrb[0].mxu0 %v169
      %v440 = vpop.f32.mrb[0].mxu0
      %v441 = vadd.f32 %v263, %v440
      %v442 = vpop.f32.mrb[0].mxu0
      %443 = vmatprep.mubr.f32.mxu0 0.0
      %444 = vmatmul.mubr.f32.gmra.mrb[0].mxu0 %v170
      %v445 = vpop.f32.mrb[0].mxu0
      %v446 = vadd.f32 %v263, %v445
      %v447 = vpop.f32.mrb[0].mxu0
      %448 = vmatprep.mubr.f32.mxu0 0.0
      %449 = vmatmul.mubr.f32.gmra.mrb[0].mxu0 %v171
      %v450 = vpop.f32.mrb[0].mxu0
      %v451 = vadd.f32 %v263, %v450
      %v452 = vpop.f32.mrb[0].mxu0
      %453 = vmatprep.mubr.f32.mxu0 0.0
      %454 = vmatmul.mubr.f32.gmra.mrb[0].mxu0 %v172
      %v455 = vpop.f32.mrb[0].mxu0
      %v456 = vadd.f32 %v263, %v455
      %v457 = vpop.f32.mrb[0].mxu0
      %458 = vmatprep.mubr.f32.mxu0 0.0
      %459 = vmatmul.mubr.f32.gmra.mrb[0].mxu0 %v173
      %v460 = vpop.f32.mrb[0].mxu0
      %v461 = vadd.f32 %v263, %v460
      %v462 = vpop.f32.mrb[0].mxu0
      %463 = vmatprep.mubr.f32.mxu0 0.0
      %464 = vmatmul.mubr.f32.gmra.mrb[0].mxu0 %v174
      %v465 = vpop.f32.mrb[0].mxu0
      %v466 = vadd.f32 %v263, %v465
      %v467 = vpop.f32.mrb[0].mxu0
      %468 = vmatprep.mubr.f32.mxu0 0.0
      %469 = vmatmul.mubr.f32.gmra.mrb[0].mxu0 %v175
      %v470 = vpop.f32.mrb[0].mxu0
      %v471 = vadd.f32 %v263, %v470
      %v472 = vpop.f32.mrb[0].mxu0
      %473 = vmatprep.mubr.f32.mxu0 0.0
      %474 = vmatmul.mubr.f32.gmra.mrb[0].mxu0 %v176
      %v475 = vpop.f32.mrb[0].mxu0
      %v476 = vadd.f32 %v263, %v475
      %v477 = vpop.f32.mrb[0].mxu0
      %478 = vmatprep.mubr.f32.mxu0 0.0
      %479 = vmatmul.mubr.f32.gmra.mrb[0].mxu0 %v177
      %v480 = vpop.f32.mrb[0].mxu0
      %v481 = vadd.f32 %v263, %v480
      %v482 = vpop.f32.mrb[0].mxu0
      %483 = vmatprep.mubr.f32.mxu0 0.0
      %484 = vmatmul.mubr.f32.gmra.mrb[0].mxu0 %v178
      %v485 = vpop.f32.mrb[0].mxu0
      %v486 = vadd.f32 %v263, %v485
      %v487 = vpop.f32.mrb[0].mxu0
      %488 = vmatprep.mubr.f32.mxu0 0.0
      %489 = vmatmul.mubr.f32.gmra.mrb[0].mxu0 %v179
      %v490 = vpop.f32.mrb[0].mxu0
      %v491 = vadd.f32 %v263, %v490
      %v492 = vpop.f32.mrb[0].mxu0
      %493 = vmatprep.mubr.f32.mxu0 0.0
      %494 = vmatmul.mubr.f32.gmra.mrb[0].mxu0 %v180
      %v495 = vpop.f32.mrb[0].mxu0
      %v496 = vadd.f32 %v263, %v495
      %v497 = vpop.f32.mrb[0].mxu0
      %498 = vmatprep.mubr.f32.mxu0 0.0
      %499 = vmatmul.mubr.f32.gmra.mrb[0].mxu0 %v181
      %v500 = vpop.f32.mrb[0].mxu0
      %v501 = vadd.f32 %v263, %v500
      %v502 = vpop.f32.mrb[0].mxu0
      %503 = vmatprep.mubr.f32.mxu0 0.0
      %504 = vmatmul.mubr.f32.gmra.mrb[0].mxu0 %v182
      %v505 = vpop.f32.mrb[0].mxu0
      %v506 = vadd.f32 %v263, %v505
      %v507 = vpop.f32.mrb[0].mxu0
      %508 = vmatprep.mubr.f32.mxu0 0.0
      %509 = vmatmul.mubr.f32.gmra.mrb[0].mxu0 %v183
      %v510 = vpop.f32.mrb[0].mxu0
      %v511 = vadd.f32 %v263, %v510
      %v512 = vpop.f32.mrb[0].mxu0
      %513 = vmatprep.mubr.f32.mxu0 0.0
      %514 = vmatmul.mubr.f32.gmra.mrb[0].mxu0 %v184
      %v515 = vpop.f32.mrb[0].mxu0
      %v516 = vadd.f32 %v263, %v515
      %v517 = vpop.f32.mrb[0].mxu0
      %518 = vmatprep.mubr.f32.mxu0 0.0
      %519 = vmatmul.mubr.f32.gmra.mrb[0].mxu0 %v185
      %v520 = vpop.f32.mrb[0].mxu0
      %v521 = vadd.f32 %v263, %v520
      %v522 = vpop.f32.mrb[0].mxu0
      %523 = vmatprep.mubr.f32.mxu0 0.0
      %524 = vmatmul.mubr.f32.gmra.mrb[0].mxu0 %v186
      %v525 = vpop.f32.mrb[0].mxu0
      %v526 = vadd.f32 %v263, %v525
      %v527 = vpop.f32.mrb[0].mxu0
      %528 = vmatprep.mubr.f32.mxu0 0.0
      %529 = vmatmul.mubr.f32.gmra.mrb[0].mxu0 %v187
      %v530 = vpop.f32.mrb[0].mxu0
      %v531 = vadd.f32 %v263, %v530
      %v532 = vpop.f32.mrb[0].mxu0
      %533 = vmatprep.mubr.f32.mxu0 0.0
      %534 = vmatmul.mubr.f32.gmra.mrb[0].mxu0 %v188
      %v535 = vpop.f32.mrb[0].mxu0
      %v536 = vadd.f32 %v263, %v535
      %v537 = vpop.f32.mrb[0].mxu0
      %538 = vmatprep.mubr.f32.mxu0 0.0
      %539 = vmatmul.mubr.f32.gmra.mrb[0].mxu0 %v189
      %v540 = vpop.f32.mrb[0].mxu0
      %v541 = vadd.f32 %v263, %v540
      %v542 = vpop.f32.mrb[0].mxu0
      %543 = vmatprep.mubr.f32.mxu0 0.0
      %544 = vmatmul.mubr.f32.gmra.mrb[0].mxu0 %v190
      %v545 = vpop.f32.mrb[0].mxu0
      %v546 = vadd.f32 %v263, %v545
      %v547 = vpop.f32.mrb[0].mxu0
      %548 = vmatprep.mubr.f32.mxu0 0.0
      %549 = vmatmul.mubr.f32.gmra.mrb[0].mxu0 %v191
      %v550 = vpop.f32.mrb[0].mxu0
      %v551 = vadd.f32 %v263, %v550
      %v552 = vpop.f32.mrb[0].mxu0
      %553 = vmatprep.mubr.f32.mxu0 0.0
      %554 = vmatmul.mubr.f32.gmra.mrb[0].mxu0 %v192
      %v555 = vpop.f32.mrb[0].mxu0
      %v556 = vadd.f32 %v263, %v555
      %v557 = vpop.f32.mrb[0].mxu0
      %558 = vmatprep.mubr.f32.mxu0 0.0
      %559 = vmatmul.mubr.f32.gmra.mrb[0].mxu0 %v193
      %v560 = vpop.f32.mrb[0].mxu0
      %v561 = vadd.f32 %v263, %v560
      %v562 = vpop.f32.mrb[0].mxu0
      %563 = vmatprep.mubr.f32.mxu0 0.0
      %564 = vmatmul.mubr.f32.gmra.mrb[0].mxu0 %v194
      %v565 = vpop.f32.mrb[0].mxu0
      %v566 = vadd.f32 %v263, %v565
      %v567 = vpop.f32.mrb[0].mxu0
      %568 = vmatprep.mubr.f32.mxu0 0.0
      %569 = vmatmul.mubr.f32.gmra.mrb[0].mxu0 %v195
      %v570 = vpop.f32.mrb[0].mxu0
      %v571 = vadd.f32 %v263, %v570
      %v572 = vpop.f32.mrb[0].mxu0
      %573 = vmatprep.mubr.f32.mxu0 0.0
      %574 = vmatmul.mubr.f32.gmra.mrb[0].mxu0 %v196
      %v575 = vpop.f32.mrb[0].mxu0
      %v576 = vadd.f32 %v263, %v575
      %v577 = vpop.f32.mrb[0].mxu0
      %578 = vmatprep.mubr.f32.mxu0 0.0
      %579 = vmatmul.mubr.f32.gmra.mrb[0].mxu0 %v197
      %v580 = vpop.f32.mrb[0].mxu0
      %v581 = vadd.f32 %v263, %v580
      %v582 = vpop.f32.mrb[0].mxu0
      %583 = vmatprep.mubr.f32.mxu0 0.0
      %584 = vmatmul.mubr.f32.gmra.mrb[0].mxu0 %v198
      %v585 = vpop.f32.mrb[0].mxu0
      %v586 = vadd.f32 %v263, %v585
      %v587 = vpop.f32.mrb[0].mxu0
      %588 = vmatprep.mubr.f32.mxu0 0.0
      %589 = vmatmul.mubr.f32.gmra.mrb[0].mxu0 %v199
      %v590 = vpop.f32.mrb[0].mxu0
      %v591 = vadd.f32 %v263, %v590
      %v592 = vpop.f32.mrb[0].mxu0
      %593 = vmatprep.mubr.f32.mxu0 0.0
      %594 = vmatmul.mubr.f32.gmra.mrb[0].mxu0 %v200
      %v595 = vpop.f32.mrb[0].mxu0
      %v596 = vadd.f32 %v263, %v595
      %v597 = vpop.f32.mrb[0].mxu0
      %598 = vmatprep.mubr.f32.mxu0 0.0
      %599 = vmatmul.mubr.f32.gmra.mrb[0].mxu0 %v201
      %v600 = vpop.f32.mrb[0].mxu0
      %v601 = vadd.f32 %v263, %v600
      %v602 = vpop.f32.mrb[0].mxu0
      %603 = vmatprep.mubr.f32.mxu0 0.0
      %604 = vmatmul.mubr.f32.gmra.mrb[0].mxu0 %v202
      %v605 = vpop.f32.mrb[0].mxu0
      %v606 = vadd.f32 %v263, %v605
      %v607 = vpop.f32.mrb[0].mxu0
      %608 = vmatprep.mubr.f32.mxu0 0.0
      %609 = vmatmul.mubr.f32.gmra.mrb[0].mxu0 %v203
      %v610 = vpop.f32.mrb[0].mxu0
      %v611 = vadd.f32 %v263, %v610
      %v612 = vpop.f32.mrb[0].mxu0
      %613 = vmatprep.mubr.f32.mxu0 0.0
      %614 = vmatmul.mubr.f32.gmra.mrb[0].mxu0 %v204
      %v615 = vpop.f32.mrb[0].mxu0
      %v616 = vadd.f32 %v263, %v615
      %v617 = vpop.f32.mrb[0].mxu0
      %618 = vmatprep.mubr.f32.mxu0 0.0
      %619 = vmatmul.mubr.f32.gmra.mrb[0].mxu0 %v205
      %v620 = vpop.f32.mrb[0].mxu0
      %v621 = vadd.f32 %v263, %v620
      %v622 = vpop.f32.mrb[0].mxu0
      %623 = vmatprep.mubr.f32.mxu0 0.0
      %624 = vmatmul.mubr.f32.gmra.mrb[0].mxu0 %v206
      %v625 = vpop.f32.mrb[0].mxu0
      %v626 = vadd.f32 %v263, %v625
      %v627 = vpop.f32.mrb[0].mxu0
      %628 = vmatprep.mubr.f32.mxu0 0.0
      %629 = vmatmul.mubr.f32.gmra.mrb[0].mxu0 %v207
      %v630 = vpop.f32.mrb[0].mxu0
      %v631 = vadd.f32 %v263, %v630
      %v632 = vpop.f32.mrb[0].mxu0
      %633 = vmatprep.mubr.f32.mxu0 0.0
      %634 = vmatmul.mubr.f32.gmra.mrb[0].mxu0 %v208
      %v635 = vpop.f32.mrb[0].mxu0
      %v636 = vadd.f32 %v263, %v635
      %v637 = vpop.f32.mrb[0].mxu0
      %638 = vmatprep.mubr.f32.mxu0 0.0
      %639 = vmatmul.mubr.f32.gmra.mrb[0].mxu0 %v209
      %v640 = vpop.f32.mrb[0].mxu0
      %v641 = vadd.f32 %v263, %v640
      %v642 = vpop.f32.mrb[0].mxu0
      %643 = vmatprep.mubr.f32.mxu0 0.0
      %644 = vmatmul.mubr.f32.gmra.mrb[0].mxu0 %v210
      %v645 = vpop.f32.mrb[0].mxu0
      %v646 = vadd.f32 %v263, %v645
      %v647 = vpop.f32.mrb[0].mxu0
      %648 = vdwg.mxu0
      %v649 = vmax.f32 %v331, 0.0
      %v650 = vmax.f32 %v336, 0.0
      %v651 = vmax.f32 %v341, 0.0
      %v652 = vmax.f32 %v346, 0.0
      %v653 = vmax.f32 %v351, 0.0
      %v654 = vmax.f32 %v356, 0.0
      %v655 = vmax.f32 %v361, 0.0
      %v656 = vmax.f32 %v366, 0.0
      %v657 = vmax.f32 %v371, 0.0
      %v658 = vmax.f32 %v376, 0.0
      %v659 = vmax.f32 %v381, 0.0
      %v660 = vmax.f32 %v386, 0.0
      %v661 = vmax.f32 %v391, 0.0
      %v662 = vmax.f32 %v396, 0.0
      %v663 = vmax.f32 %v401, 0.0
      %v664 = vmax.f32 %v406, 0.0
      %v665 = vmax.f32 %v411, 0.0
      %v666 = vmax.f32 %v416, 0.0
      %v667 = vmax.f32 %v421, 0.0
      %v668 = vmax.f32 %v426, 0.0
      %v669 = vmax.f32 %v431, 0.0
      %v670 = vmax.f32 %v436, 0.0
      %v671 = vmax.f32 %v441, 0.0
      %v672 = vmax.f32 %v446, 0.0
      %v673 = vmax.f32 %v451, 0.0
      %v674 = vmax.f32 %v456, 0.0
      %v675 = vmax.f32 %v461, 0.0
      %v676 = vmax.f32 %v466, 0.0
      %v677 = vmax.f32 %v471, 0.0
      %v678 = vmax.f32 %v476, 0.0
      %v679 = vmax.f32 %v481, 0.0
      %v680 = vmax.f32 %v486, 0.0
      %v681 = vmax.f32 %v491, 0.0
      %v682 = vmax.f32 %v496, 0.0
      %v683 = vmax.f32 %v501, 0.0
      %v684 = vmax.f32 %v506, 0.0
      %v685 = vmax.f32 %v511, 0.0
      %v686 = vmax.f32 %v516, 0.0
      %v687 = vmax.f32 %v521, 0.0
      %v688 = vmax.f32 %v526, 0.0
      %v689 = vmax.f32 %v531, 0.0
      %v690 = vmax.f32 %v536, 0.0
      %v691 = vmax.f32 %v541, 0.0
      %v692 = vmax.f32 %v546, 0.0
      %v693 = vmax.f32 %v551, 0.0
      %v694 = vmax.f32 %v556, 0.0
      %v695 = vmax.f32 %v561, 0.0
      %v696 = vmax.f32 %v566, 0.0
      %v697 = vmax.f32 %v571, 0.0
      %v698 = vmax.f32 %v576, 0.0
      %v699 = vmax.f32 %v581, 0.0
      %v700 = vmax.f32 %v586, 0.0
      %v701 = vmax.f32 %v591, 0.0
      %v702 = vmax.f32 %v596, 0.0
      %v703 = vmax.f32 %v601, 0.0
      %v704 = vmax.f32 %v606, 0.0
      %v705 = vmax.f32 %v611, 0.0
      %v706 = vmax.f32 %v616, 0.0
      %v707 = vmax.f32 %v621, 0.0
      %v708 = vmax.f32 %v626, 0.0
      %v709 = vmax.f32 %v631, 0.0
      %v710 = vmax.f32 %v636, 0.0
      %v711 = vmax.f32 %v641, 0.0
      %v712 = vmax.f32 %v646, 0.0
      %v713 = vlaneseq
      %v714 = vshrl.u32 %v713, 7
      %v715 = vsub.s32 1, %v714
      %v716 = vrot.slane %v259, %v715
      %717 = vmatprep.subr.mxu0 0.0
      %718 = vmatpush1.msra.mxu0 %v227
      %719 = vmatprep.subr.mxu0 0.0
      %720 = vmatpush1.msra.mxu0 %v228
      %721 = vmatprep.subr.mxu0 0.0
      %722 = vmatpush1.msra.mxu0 %v229
      %723 = vmatprep.subr.mxu0 0.0
      %724 = vmatpush1.msra.mxu0 %v230
      %725 = vmatprep.subr.mxu0 0.0
      %726 = vmatpush1.msra.mxu0 %v231
      %727 = vmatprep.subr.mxu0 0.0
      %728 = vmatpush1.msra.mxu0 %v232
      %729 = vmatprep.subr.mxu0 0.0
      %730 = vmatpush1.msra.mxu0 %v233
      %731 = vmatprep.subr.mxu0 0.0
      %732 = vmatpush1.msra.mxu0 %v234
      %733 = vmatprep.subr.mxu0 0.0
      %734 = vmatpush1.msra.mxu0 %v235
      %735 = vmatprep.subr.mxu0 0.0
      %736 = vmatpush1.msra.mxu0 %v236
      %737 = vmatprep.subr.mxu0 0.0
      %738 = vmatpush1.msra.mxu0 %v237
      %739 = vmatprep.subr.mxu0 0.0
      %740 = vmatpush1.msra.mxu0 %v238
      %741 = vmatprep.subr.mxu0 0.0
      %742 = vmatpush1.msra.mxu0 %v239
      %743 = vmatprep.subr.mxu0 0.0
      %744 = vmatpush1.msra.mxu0 %v240
      %745 = vmatprep.subr.mxu0 0.0
      %746 = vmatpush1.msra.mxu0 %v241
      %747 = vmatprep.subr.mxu0 0.0
      %748 = vmatpush1.msra.mxu0 %v242
      %749 = vmatprep.subr.mxu0 0.0
      %750 = vmatpush1.msra.mxu0 0.0
      %751 = vmatprep.subr.mxu0 0.0
      %752 = vmatpush1.msra.mxu0 0.0
      %753 = vmatprep.subr.mxu0 0.0
      %754 = vmatpush1.msra.mxu0 0.0
      %755 = vmatprep.subr.mxu0 0.0
      %756 = vmatpush1.msra.mxu0 0.0
      %757 = vmatprep.subr.mxu0 0.0
      %758 = vmatpush1.msra.mxu0 0.0
      %759 = vmatprep.subr.mxu0 0.0
      %760 = vmatpush1.msra.mxu0 0.0
      %761 = vmatprep.subr.mxu0 0.0
      %762 = vmatpush1.msra.mxu0 0.0
      %763 = vmatprep.subr.mxu0 0.0
      %764 = vmatpush1.msra.mxu0 0.0
      %765 = vmatprep.subr.mxu0 0.0
      %766 = vmatpush1.msra.mxu0 0.0
      %767 = vmatprep.subr.mxu0 0.0
      %768 = vmatpush1.msra.mxu0 0.0
      %769 = vmatprep.subr.mxu0 0.0
      %770 = vmatpush1.msra.mxu0 0.0
      %771 = vmatprep.subr.mxu0 0.0
      %772 = vmatpush1.msra.mxu0 0.0
      %773 = vmatprep.subr.mxu0 0.0
      %774 = vmatpush1.msra.mxu0 0.0
      %775 = vmatprep.subr.mxu0 0.0
      %776 = vmatpush1.msra.mxu0 0.0
      %777 = vmatprep.subr.mxu0 0.0
      %778 = vmatpush1.msra.mxu0 0.0
      %779 = vmatprep.subr.mxu0 0.0
      %780 = vmatpush1.msra.mxu0 0.0
      %781 = vmatprep.mubr.f32.mxu0 0.0
      %782 = vmatmul.mubr.f32.gmra.mrb[0].mxu0 %v649
      %v783 = vpop.f32.mrb[0].mxu0
      %v784 = vadd.f32 %v716, %v783
      %v785 = vpop.f32.mrb[0].mxu0
      %786 = vmatprep.mubr.f32.mxu0 0.0
      %787 = vmatmul.mubr.f32.gmra.mrb[0].mxu0 %v650
      %v788 = vpop.f32.mrb[0].mxu0
      %v789 = vadd.f32 %v716, %v788
      %v790 = vpop.f32.mrb[0].mxu0
      %791 = vmatprep.mubr.f32.mxu0 0.0
      %792 = vmatmul.mubr.f32.gmra.mrb[0].mxu0 %v651
      %v793 = vpop.f32.mrb[0].mxu0
      %v794 = vadd.f32 %v716, %v793
      %v795 = vpop.f32.mrb[0].mxu0
      %796 = vmatprep.mubr.f32.mxu0 0.0
      %797 = vmatmul.mubr.f32.gmra.mrb[0].mxu0 %v652
      %v798 = vpop.f32.mrb[0].mxu0
      %v799 = vadd.f32 %v716, %v798
      %v800 = vpop.f32.mrb[0].mxu0
      %801 = vmatprep.mubr.f32.mxu0 0.0
      %802 = vmatmul.mubr.f32.gmra.mrb[0].mxu0 %v653
      %v803 = vpop.f32.mrb[0].mxu0
      %v804 = vadd.f32 %v716, %v803
      %v805 = vpop.f32.mrb[0].mxu0
      %806 = vmatprep.mubr.f32.mxu0 0.0
      %807 = vmatmul.mubr.f32.gmra.mrb[0].mxu0 %v654
      %v808 = vpop.f32.mrb[0].mxu0
      %v809 = vadd.f32 %v716, %v808
      %v810 = vpop.f32.mrb[0].mxu0
      %811 = vmatprep.mubr.f32.mxu0 0.0
      %812 = vmatmul.mubr.f32.gmra.mrb[0].mxu0 %v655
      %v813 = vpop.f32.mrb[0].mxu0
      %v814 = vadd.f32 %v716, %v813
      %v815 = vpop.f32.mrb[0].mxu0
      %816 = vmatprep.mubr.f32.mxu0 0.0
      %817 = vmatmul.mubr.f32.gmra.mrb[0].mxu0 %v656
      %v818 = vpop.f32.mrb[0].mxu0
      %v819 = vadd.f32 %v716, %v818
      %v820 = vpop.f32.mrb[0].mxu0
      %821 = vmatprep.mubr.f32.mxu0 0.0
      %822 = vmatmul.mubr.f32.gmra.mrb[0].mxu0 %v657
      %v823 = vpop.f32.mrb[0].mxu0
      %v824 = vadd.f32 %v716, %v823
      %v825 = vpop.f32.mrb[0].mxu0
      %826 = vmatprep.mubr.f32.mxu0 0.0
      %827 = vmatmul.mubr.f32.gmra.mrb[0].mxu0 %v658
      %v828 = vpop.f32.mrb[0].mxu0
      %v829 = vadd.f32 %v716, %v828
      %v830 = vpop.f32.mrb[0].mxu0
      %831 = vmatprep.mubr.f32.mxu0 0.0
      %832 = vmatmul.mubr.f32.gmra.mrb[0].mxu0 %v659
      %v833 = vpop.f32.mrb[0].mxu0
      %v834 = vadd.f32 %v716, %v833
      %v835 = vpop.f32.mrb[0].mxu0
      %836 = vmatprep.mubr.f32.mxu0 0.0
      %837 = vmatmul.mubr.f32.gmra.mrb[0].mxu0 %v660
      %v838 = vpop.f32.mrb[0].mxu0
      %v839 = vadd.f32 %v716, %v838
      %v840 = vpop.f32.mrb[0].mxu0
      %841 = vmatprep.mubr.f32.mxu0 0.0
      %842 = vmatmul.mubr.f32.gmra.mrb[0].mxu0 %v661
      %v843 = vpop.f32.mrb[0].mxu0
      %v844 = vadd.f32 %v716, %v843
      %v845 = vpop.f32.mrb[0].mxu0
      %846 = vmatprep.mubr.f32.mxu0 0.0
      %847 = vmatmul.mubr.f32.gmra.mrb[0].mxu0 %v662
      %v848 = vpop.f32.mrb[0].mxu0
      %v849 = vadd.f32 %v716, %v848
      %v850 = vpop.f32.mrb[0].mxu0
      %851 = vmatprep.mubr.f32.mxu0 0.0
      %852 = vmatmul.mubr.f32.gmra.mrb[0].mxu0 %v663
      %v853 = vpop.f32.mrb[0].mxu0
      %v854 = vadd.f32 %v716, %v853
      %v855 = vpop.f32.mrb[0].mxu0
      %856 = vmatprep.mubr.f32.mxu0 0.0
      %857 = vmatmul.mubr.f32.gmra.mrb[0].mxu0 %v664
      %v858 = vpop.f32.mrb[0].mxu0
      %v859 = vadd.f32 %v716, %v858
      %v860 = vpop.f32.mrb[0].mxu0
      %861 = vmatprep.mubr.f32.mxu0 0.0
      %862 = vmatmul.mubr.f32.gmra.mrb[0].mxu0 %v665
      %v863 = vpop.f32.mrb[0].mxu0
      %v864 = vadd.f32 %v716, %v863
      %v865 = vpop.f32.mrb[0].mxu0
      %866 = vmatprep.mubr.f32.mxu0 0.0
      %867 = vmatmul.mubr.f32.gmra.mrb[0].mxu0 %v666
      %v868 = vpop.f32.mrb[0].mxu0
      %v869 = vadd.f32 %v716, %v868
      %v870 = vpop.f32.mrb[0].mxu0
      %871 = vmatprep.mubr.f32.mxu0 0.0
      %872 = vmatmul.mubr.f32.gmra.mrb[0].mxu0 %v667
      %v873 = vpop.f32.mrb[0].mxu0
      %v874 = vadd.f32 %v716, %v873
      %v875 = vpop.f32.mrb[0].mxu0
      %876 = vmatprep.mubr.f32.mxu0 0.0
      %877 = vmatmul.mubr.f32.gmra.mrb[0].mxu0 %v668
      %v878 = vpop.f32.mrb[0].mxu0
      %v879 = vadd.f32 %v716, %v878
      %v880 = vpop.f32.mrb[0].mxu0
      %881 = vmatprep.mubr.f32.mxu0 0.0
      %882 = vmatmul.mubr.f32.gmra.mrb[0].mxu0 %v669
      %v883 = vpop.f32.mrb[0].mxu0
      %v884 = vadd.f32 %v716, %v883
      %v885 = vpop.f32.mrb[0].mxu0
      %886 = vmatprep.mubr.f32.mxu0 0.0
      %887 = vmatmul.mubr.f32.gmra.mrb[0].mxu0 %v670
      %v888 = vpop.f32.mrb[0].mxu0
      %v889 = vadd.f32 %v716, %v888
      %v890 = vpop.f32.mrb[0].mxu0
      %891 = vmatprep.mubr.f32.mxu0 0.0
      %892 = vmatmul.mubr.f32.gmra.mrb[0].mxu0 %v671
      %v893 = vpop.f32.mrb[0].mxu0
      %v894 = vadd.f32 %v716, %v893
      %v895 = vpop.f32.mrb[0].mxu0
      %896 = vmatprep.mubr.f32.mxu0 0.0
      %897 = vmatmul.mubr.f32.gmra.mrb[0].mxu0 %v672
      %v898 = vpop.f32.mrb[0].mxu0
      %v899 = vadd.f32 %v716, %v898
      %v900 = vpop.f32.mrb[0].mxu0
      %901 = vmatprep.mubr.f32.mxu0 0.0
      %902 = vmatmul.mubr.f32.gmra.mrb[0].mxu0 %v673
      %v903 = vpop.f32.mrb[0].mxu0
      %v904 = vadd.f32 %v716, %v903
      %v905 = vpop.f32.mrb[0].mxu0
      %906 = vmatprep.mubr.f32.mxu0 0.0
      %907 = vmatmul.mubr.f32.gmra.mrb[0].mxu0 %v674
      %v908 = vpop.f32.mrb[0].mxu0
      %v909 = vadd.f32 %v716, %v908
      %v910 = vpop.f32.mrb[0].mxu0
      %911 = vmatprep.mubr.f32.mxu0 0.0
      %912 = vmatmul.mubr.f32.gmra.mrb[0].mxu0 %v675
      %v913 = vpop.f32.mrb[0].mxu0
      %v914 = vadd.f32 %v716, %v913
      %v915 = vpop.f32.mrb[0].mxu0
      %916 = vmatprep.mubr.f32.mxu0 0.0
      %917 = vmatmul.mubr.f32.gmra.mrb[0].mxu0 %v676
      %v918 = vpop.f32.mrb[0].mxu0
      %v919 = vadd.f32 %v716, %v918
      %v920 = vpop.f32.mrb[0].mxu0
      %921 = vmatprep.mubr.f32.mxu0 0.0
      %922 = vmatmul.mubr.f32.gmra.mrb[0].mxu0 %v677
      %v923 = vpop.f32.mrb[0].mxu0
      %v924 = vadd.f32 %v716, %v923
      %v925 = vpop.f32.mrb[0].mxu0
      %926 = vmatprep.mubr.f32.mxu0 0.0
      %927 = vmatmul.mubr.f32.gmra.mrb[0].mxu0 %v678
      %v928 = vpop.f32.mrb[0].mxu0
      %v929 = vadd.f32 %v716, %v928
      %v930 = vpop.f32.mrb[0].mxu0
      %931 = vmatprep.mubr.f32.mxu0 0.0
      %932 = vmatmul.mubr.f32.gmra.mrb[0].mxu0 %v679
      %v933 = vpop.f32.mrb[0].mxu0
      %v934 = vadd.f32 %v716, %v933
      %v935 = vpop.f32.mrb[0].mxu0
      %936 = vmatprep.mubr.f32.mxu0 0.0
      %937 = vmatmul.mubr.f32.gmra.mrb[0].mxu0 %v680
      %v938 = vpop.f32.mrb[0].mxu0
      %v939 = vadd.f32 %v716, %v938
      %v940 = vpop.f32.mrb[0].mxu0
      %941 = vmatprep.mubr.f32.mxu0 0.0
      %942 = vmatmul.mubr.f32.gmra.mrb[0].mxu0 %v681
      %v943 = vpop.f32.mrb[0].mxu0
      %v944 = vadd.f32 %v716, %v943
      %v945 = vpop.f32.mrb[0].mxu0
      %946 = vmatprep.mubr.f32.mxu0 0.0
      %947 = vmatmul.mubr.f32.gmra.mrb[0].mxu0 %v682
      %v948 = vpop.f32.mrb[0].mxu0
      %v949 = vadd.f32 %v716, %v948
      %v950 = vpop.f32.mrb[0].mxu0
      %951 = vmatprep.mubr.f32.mxu0 0.0
      %952 = vmatmul.mubr.f32.gmra.mrb[0].mxu0 %v683
      %v953 = vpop.f32.mrb[0].mxu0
      %v954 = vadd.f32 %v716, %v953
      %v955 = vpop.f32.mrb[0].mxu0
      %956 = vmatprep.mubr.f32.mxu0 0.0
      %957 = vmatmul.mubr.f32.gmra.mrb[0].mxu0 %v684
      %v958 = vpop.f32.mrb[0].mxu0
      %v959 = vadd.f32 %v716, %v958
      %v960 = vpop.f32.mrb[0].mxu0
      %961 = vmatprep.mubr.f32.mxu0 0.0
      %962 = vmatmul.mubr.f32.gmra.mrb[0].mxu0 %v685
      %v963 = vpop.f32.mrb[0].mxu0
      %v964 = vadd.f32 %v716, %v963
      %v965 = vpop.f32.mrb[0].mxu0
      %966 = vmatprep.mubr.f32.mxu0 0.0
      %967 = vmatmul.mubr.f32.gmra.mrb[0].mxu0 %v686
      %v968 = vpop.f32.mrb[0].mxu0
      %v969 = vadd.f32 %v716, %v968
      %v970 = vpop.f32.mrb[0].mxu0
      %971 = vmatprep.mubr.f32.mxu0 0.0
      %972 = vmatmul.mubr.f32.gmra.mrb[0].mxu0 %v687
      %v973 = vpop.f32.mrb[0].mxu0
      %v974 = vadd.f32 %v716, %v973
      %v975 = vpop.f32.mrb[0].mxu0
      %976 = vmatprep.mubr.f32.mxu0 0.0
      %977 = vmatmul.mubr.f32.gmra.mrb[0].mxu0 %v688
      %v978 = vpop.f32.mrb[0].mxu0
      %v979 = vadd.f32 %v716, %v978
      %v980 = vpop.f32.mrb[0].mxu0
      %981 = vmatprep.mubr.f32.mxu0 0.0
      %982 = vmatmul.mubr.f32.gmra.mrb[0].mxu0 %v689
      %v983 = vpop.f32.mrb[0].mxu0
      %v984 = vadd.f32 %v716, %v983
      %v985 = vpop.f32.mrb[0].mxu0
      %986 = vmatprep.mubr.f32.mxu0 0.0
      %987 = vmatmul.mubr.f32.gmra.mrb[0].mxu0 %v690
      %v988 = vpop.f32.mrb[0].mxu0
      %v989 = vadd.f32 %v716, %v988
      %v990 = vpop.f32.mrb[0].mxu0
      %991 = vmatprep.mubr.f32.mxu0 0.0
      %992 = vmatmul.mubr.f32.gmra.mrb[0].mxu0 %v691
      %v993 = vpop.f32.mrb[0].mxu0
      %v994 = vadd.f32 %v716, %v993
      %v995 = vpop.f32.mrb[0].mxu0
      %996 = vmatprep.mubr.f32.mxu0 0.0
      %997 = vmatmul.mubr.f32.gmra.mrb[0].mxu0 %v692
      %v998 = vpop.f32.mrb[0].mxu0
      %v999 = vadd.f32 %v716, %v998
      %v1000 = vpop.f32.mrb[0].mxu0
      %1001 = vmatprep.mubr.f32.mxu0 0.0
      %1002 = vmatmul.mubr.f32.gmra.mrb[0].mxu0 %v693
      %v1003 = vpop.f32.mrb[0].mxu0
      %v1004 = vadd.f32 %v716, %v1003
      %v1005 = vpop.f32.mrb[0].mxu0
      %1006 = vmatprep.mubr.f32.mxu0 0.0
      %1007 = vmatmul.mubr.f32.gmra.mrb[0].mxu0 %v694
      %v1008 = vpop.f32.mrb[0].mxu0
      %v1009 = vadd.f32 %v716, %v1008
      %v1010 = vpop.f32.mrb[0].mxu0
      %1011 = vmatprep.mubr.f32.mxu0 0.0
      %1012 = vmatmul.mubr.f32.gmra.mrb[0].mxu0 %v695
      %v1013 = vpop.f32.mrb[0].mxu0
      %v1014 = vadd.f32 %v716, %v1013
      %v1015 = vpop.f32.mrb[0].mxu0
      %1016 = vmatprep.mubr.f32.mxu0 0.0
      %1017 = vmatmul.mubr.f32.gmra.mrb[0].mxu0 %v696
      %v1018 = vpop.f32.mrb[0].mxu0
      %v1019 = vadd.f32 %v716, %v1018
      %v1020 = vpop.f32.mrb[0].mxu0
      %1021 = vmatprep.mubr.f32.mxu0 0.0
      %1022 = vmatmul.mubr.f32.gmra.mrb[0].mxu0 %v697
      %v1023 = vpop.f32.mrb[0].mxu0
      %v1024 = vadd.f32 %v716, %v1023
      %v1025 = vpop.f32.mrb[0].mxu0
      %1026 = vmatprep.mubr.f32.mxu0 0.0
      %1027 = vmatmul.mubr.f32.gmra.mrb[0].mxu0 %v698
      %v1028 = vpop.f32.mrb[0].mxu0
      %v1029 = vadd.f32 %v716, %v1028
      %v1030 = vpop.f32.mrb[0].mxu0
      %1031 = vmatprep.mubr.f32.mxu0 0.0
      %1032 = vmatmul.mubr.f32.gmra.mrb[0].mxu0 %v699
      %v1033 = vpop.f32.mrb[0].mxu0
      %v1034 = vadd.f32 %v716, %v1033
      %v1035 = vpop.f32.mrb[0].mxu0
      %1036 = vmatprep.mubr.f32.mxu0 0.0
      %1037 = vmatmul.mubr.f32.gmra.mrb[0].mxu0 %v700
      %v1038 = vpop.f32.mrb[0].mxu0
      %v1039 = vadd.f32 %v716, %v1038
      %v1040 = vpop.f32.mrb[0].mxu0
      %1041 = vmatprep.mubr.f32.mxu0 0.0
      %1042 = vmatmul.mubr.f32.gmra.mrb[0].mxu0 %v701
      %v1043 = vpop.f32.mrb[0].mxu0
      %v1044 = vadd.f32 %v716, %v1043
      %v1045 = vpop.f32.mrb[0].mxu0
      %1046 = vmatprep.mubr.f32.mxu0 0.0
      %1047 = vmatmul.mubr.f32.gmra.mrb[0].mxu0 %v702
      %v1048 = vpop.f32.mrb[0].mxu0
      %v1049 = vadd.f32 %v716, %v1048
      %v1050 = vpop.f32.mrb[0].mxu0
      %1051 = vmatprep.mubr.f32.mxu0 0.0
      %1052 = vmatmul.mubr.f32.gmra.mrb[0].mxu0 %v703
      %v1053 = vpop.f32.mrb[0].mxu0
      %v1054 = vadd.f32 %v716, %v1053
      %v1055 = vpop.f32.mrb[0].mxu0
      %1056 = vmatprep.mubr.f32.mxu0 0.0
      %1057 = vmatmul.mubr.f32.gmra.mrb[0].mxu0 %v704
      %v1058 = vpop.f32.mrb[0].mxu0
      %v1059 = vadd.f32 %v716, %v1058
      %v1060 = vpop.f32.mrb[0].mxu0
      %1061 = vmatprep.mubr.f32.mxu0 0.0
      %1062 = vmatmul.mubr.f32.gmra.mrb[0].mxu0 %v705
      %v1063 = vpop.f32.mrb[0].mxu0
      %v1064 = vadd.f32 %v716, %v1063
      %v1065 = vpop.f32.mrb[0].mxu0
      %1066 = vmatprep.mubr.f32.mxu0 0.0
      %1067 = vmatmul.mubr.f32.gmra.mrb[0].mxu0 %v706
      %v1068 = vpop.f32.mrb[0].mxu0
      %v1069 = vadd.f32 %v716, %v1068
      %v1070 = vpop.f32.mrb[0].mxu0
      %1071 = vmatprep.mubr.f32.mxu0 0.0
      %1072 = vmatmul.mubr.f32.gmra.mrb[0].mxu0 %v707
      %v1073 = vpop.f32.mrb[0].mxu0
      %v1074 = vadd.f32 %v716, %v1073
      %v1075 = vpop.f32.mrb[0].mxu0
      %1076 = vmatprep.mubr.f32.mxu0 0.0
      %1077 = vmatmul.mubr.f32.gmra.mrb[0].mxu0 %v708
      %v1078 = vpop.f32.mrb[0].mxu0
      %v1079 = vadd.f32 %v716, %v1078
      %v1080 = vpop.f32.mrb[0].mxu0
      %1081 = vmatprep.mubr.f32.mxu0 0.0
      %1082 = vmatmul.mubr.f32.gmra.mrb[0].mxu0 %v709
      %v1083 = vpop.f32.mrb[0].mxu0
      %v1084 = vadd.f32 %v716, %v1083
      %v1085 = vpop.f32.mrb[0].mxu0
      %1086 = vmatprep.mubr.f32.mxu0 0.0
      %1087 = vmatmul.mubr.f32.gmra.mrb[0].mxu0 %v710
      %v1088 = vpop.f32.mrb[0].mxu0
      %v1089 = vadd.f32 %v716, %v1088
      %v1090 = vpop.f32.mrb[0].mxu0
      %1091 = vmatprep.mubr.f32.mxu0 0.0
      %1092 = vmatmul.mubr.f32.gmra.mrb[0].mxu0 %v711
      %v1093 = vpop.f32.mrb[0].mxu0
      %v1094 = vadd.f32 %v716, %v1093
      %v1095 = vpop.f32.mrb[0].mxu0
      %1096 = vmatprep.mubr.f32.mxu0 0.0
      %1097 = vmatmul.mubr.f32.gmra.mrb[0].mxu0 %v712
      %v1098 = vpop.f32.mrb[0].mxu0
      %v1099 = vadd.f32 %v716, %v1098
      %v1100 = vpop.f32.mrb[0].mxu0
      %1101 = vdwg.mxu0
      %v1102 = vmax.f32 %v784, 0.0
      %v1103 = vmax.f32 %v789, 0.0
      %v1104 = vmax.f32 %v794, 0.0
      %v1105 = vmax.f32 %v799, 0.0
      %v1106 = vmax.f32 %v804, 0.0
      %v1107 = vmax.f32 %v809, 0.0
      %v1108 = vmax.f32 %v814, 0.0
      %v1109 = vmax.f32 %v819, 0.0
      %v1110 = vmax.f32 %v824, 0.0
      %v1111 = vmax.f32 %v829, 0.0
      %v1112 = vmax.f32 %v834, 0.0
      %v1113 = vmax.f32 %v839, 0.0
      %v1114 = vmax.f32 %v844, 0.0
      %v1115 = vmax.f32 %v849, 0.0
      %v1116 = vmax.f32 %v854, 0.0
      %v1117 = vmax.f32 %v859, 0.0
      %v1118 = vmax.f32 %v864, 0.0
      %v1119 = vmax.f32 %v869, 0.0
      %v1120 = vmax.f32 %v874, 0.0
      %v1121 = vmax.f32 %v879, 0.0
      %v1122 = vmax.f32 %v884, 0.0
      %v1123 = vmax.f32 %v889, 0.0
      %v1124 = vmax.f32 %v894, 0.0
      %v1125 = vmax.f32 %v899, 0.0
      %v1126 = vmax.f32 %v904, 0.0
      %v1127 = vmax.f32 %v909, 0.0
      %v1128 = vmax.f32 %v914, 0.0
      %v1129 = vmax.f32 %v919, 0.0
      %v1130 = vmax.f32 %v924, 0.0
      %v1131 = vmax.f32 %v929, 0.0
      %v1132 = vmax.f32 %v934, 0.0
      %v1133 = vmax.f32 %v939, 0.0
      %v1134 = vmax.f32 %v944, 0.0
      %v1135 = vmax.f32 %v949, 0.0
      %v1136 = vmax.f32 %v954, 0.0
      %v1137 = vmax.f32 %v959, 0.0
      %v1138 = vmax.f32 %v964, 0.0
      %v1139 = vmax.f32 %v969, 0.0
      %v1140 = vmax.f32 %v974, 0.0
      %v1141 = vmax.f32 %v979, 0.0
      %v1142 = vmax.f32 %v984, 0.0
      %v1143 = vmax.f32 %v989, 0.0
      %v1144 = vmax.f32 %v994, 0.0
      %v1145 = vmax.f32 %v999, 0.0
      %v1146 = vmax.f32 %v1004, 0.0
      %v1147 = vmax.f32 %v1009, 0.0
      %v1148 = vmax.f32 %v1014, 0.0
      %v1149 = vmax.f32 %v1019, 0.0
      %v1150 = vmax.f32 %v1024, 0.0
      %v1151 = vmax.f32 %v1029, 0.0
      %v1152 = vmax.f32 %v1034, 0.0
      %v1153 = vmax.f32 %v1039, 0.0
      %v1154 = vmax.f32 %v1044, 0.0
      %v1155 = vmax.f32 %v1049, 0.0
      %v1156 = vmax.f32 %v1054, 0.0
      %v1157 = vmax.f32 %v1059, 0.0
      %v1158 = vmax.f32 %v1064, 0.0
      %v1159 = vmax.f32 %v1069, 0.0
      %v1160 = vmax.f32 %v1074, 0.0
      %v1161 = vmax.f32 %v1079, 0.0
      %v1162 = vmax.f32 %v1084, 0.0
      %v1163 = vmax.f32 %v1089, 0.0
      %v1164 = vmax.f32 %v1094, 0.0
      %v1165 = vmax.f32 %v1099, 0.0
      %v1166 = vlaneseq
      %v1167 = vshrl.u32 %v1166, 7
      %v1168 = vsub.s32 2, %v1167
      %v1169 = vrot.slane %v259, %v1168
      %1170 = vmatprep.subr.mxu0 0.0
      %1171 = vmatpush1.msra.mxu0 %v243
      %1172 = vmatprep.subr.mxu0 0.0
      %1173 = vmatpush1.msra.mxu0 %v244
      %1174 = vmatprep.subr.mxu0 0.0
      %1175 = vmatpush1.msra.mxu0 %v245
      %1176 = vmatprep.subr.mxu0 0.0
      %1177 = vmatpush1.msra.mxu0 %v246
      %1178 = vmatprep.subr.mxu0 0.0
      %1179 = vmatpush1.msra.mxu0 %v247
      %1180 = vmatprep.subr.mxu0 0.0
      %1181 = vmatpush1.msra.mxu0 %v248
      %1182 = vmatprep.subr.mxu0 0.0
      %1183 = vmatpush1.msra.mxu0 %v249
      %1184 = vmatprep.subr.mxu0 0.0
      %1185 = vmatpush1.msra.mxu0 %v250
      %1186 = vmatprep.subr.mxu0 0.0
      %1187 = vmatpush1.msra.mxu0 %v251
      %1188 = vmatprep.subr.mxu0 0.0
      %1189 = vmatpush1.msra.mxu0 %v252
      %1190 = vmatprep.subr.mxu0 0.0
      %1191 = vmatpush1.msra.mxu0 %v253
      %1192 = vmatprep.subr.mxu0 0.0
      %1193 = vmatpush1.msra.mxu0 %v254
      %1194 = vmatprep.subr.mxu0 0.0
      %1195 = vmatpush1.msra.mxu0 %v255
      %1196 = vmatprep.subr.mxu0 0.0
      %1197 = vmatpush1.msra.mxu0 %v256
      %1198 = vmatprep.subr.mxu0 0.0
      %1199 = vmatpush1.msra.mxu0 %v257
      %1200 = vmatprep.subr.mxu0 0.0
      %1201 = vmatpush1.msra.mxu0 %v258
      %1202 = vmatprep.subr.mxu0 0.0
      %1203 = vmatpush1.msra.mxu0 0.0
      %1204 = vmatprep.subr.mxu0 0.0
      %1205 = vmatpush1.msra.mxu0 0.0
      %1206 = vmatprep.subr.mxu0 0.0
      %1207 = vmatpush1.msra.mxu0 0.0
      %1208 = vmatprep.subr.mxu0 0.0
      %1209 = vmatpush1.msra.mxu0 0.0
      %1210 = vmatprep.subr.mxu0 0.0
      %1211 = vmatpush1.msra.mxu0 0.0
      %1212 = vmatprep.subr.mxu0 0.0
      %1213 = vmatpush1.msra.mxu0 0.0
      %1214 = vmatprep.subr.mxu0 0.0
      %1215 = vmatpush1.msra.mxu0 0.0
      %1216 = vmatprep.subr.mxu0 0.0
      %1217 = vmatpush1.msra.mxu0 0.0
      %1218 = vmatprep.subr.mxu0 0.0
      %1219 = vmatpush1.msra.mxu0 0.0
      %1220 = vmatprep.subr.mxu0 0.0
      %1221 = vmatpush1.msra.mxu0 0.0
      %1222 = vmatprep.subr.mxu0 0.0
      %1223 = vmatpush1.msra.mxu0 0.0
      %1224 = vmatprep.subr.mxu0 0.0
      %1225 = vmatpush1.msra.mxu0 0.0
      %1226 = vmatprep.subr.mxu0 0.0
      %1227 = vmatpush1.msra.mxu0 0.0
      %1228 = vmatprep.subr.mxu0 0.0
      %1229 = vmatpush1.msra.mxu0 0.0
      %1230 = vmatprep.subr.mxu0 0.0
      %1231 = vmatpush1.msra.mxu0 0.0
      %1232 = vmatprep.subr.mxu0 0.0
      %1233 = vmatpush1.msra.mxu0 0.0
      %1234 = vmatprep.mubr.f32.mxu0 0.0
      %1235 = vmatmul.mubr.f32.gmra.mrb[0].mxu0 %v1102
      %v1236 = vpop.f32.mrb[0].mxu0
      %v1237 = vadd.f32 %v1169, %v1236
      %v1238 = vpop.f32.mrb[0].mxu0
      %1239 = vmatprep.mubr.f32.mxu0 0.0
      %1240 = vmatmul.mubr.f32.gmra.mrb[0].mxu0 %v1103
      %v1241 = vpop.f32.mrb[0].mxu0
      %v1242 = vadd.f32 %v1169, %v1241
      %v1243 = vpop.f32.mrb[0].mxu0
      %1244 = vmatprep.mubr.f32.mxu0 0.0
      %1245 = vmatmul.mubr.f32.gmra.mrb[0].mxu0 %v1104
      %v1246 = vpop.f32.mrb[0].mxu0
      %v1247 = vadd.f32 %v1169, %v1246
      %v1248 = vpop.f32.mrb[0].mxu0
      %1249 = vmatprep.mubr.f32.mxu0 0.0
      %1250 = vmatmul.mubr.f32.gmra.mrb[0].mxu0 %v1105
      %v1251 = vpop.f32.mrb[0].mxu0
      %v1252 = vadd.f32 %v1169, %v1251
      %v1253 = vpop.f32.mrb[0].mxu0
      %1254 = vmatprep.mubr.f32.mxu0 0.0
      %1255 = vmatmul.mubr.f32.gmra.mrb[0].mxu0 %v1106
      %v1256 = vpop.f32.mrb[0].mxu0
      %v1257 = vadd.f32 %v1169, %v1256
      %v1258 = vpop.f32.mrb[0].mxu0
      %1259 = vmatprep.mubr.f32.mxu0 0.0
      %1260 = vmatmul.mubr.f32.gmra.mrb[0].mxu0 %v1107
      %v1261 = vpop.f32.mrb[0].mxu0
      %v1262 = vadd.f32 %v1169, %v1261
      %v1263 = vpop.f32.mrb[0].mxu0
      %1264 = vmatprep.mubr.f32.mxu0 0.0
      %1265 = vmatmul.mubr.f32.gmra.mrb[0].mxu0 %v1108
      %v1266 = vpop.f32.mrb[0].mxu0
      %v1267 = vadd.f32 %v1169, %v1266
      %v1268 = vpop.f32.mrb[0].mxu0
      %1269 = vmatprep.mubr.f32.mxu0 0.0
      %1270 = vmatmul.mubr.f32.gmra.mrb[0].mxu0 %v1109
      %v1271 = vpop.f32.mrb[0].mxu0
      %v1272 = vadd.f32 %v1169, %v1271
      %v1273 = vpop.f32.mrb[0].mxu0
      %1274 = vmatprep.mubr.f32.mxu0 0.0
      %1275 = vmatmul.mubr.f32.gmra.mrb[0].mxu0 %v1110
      %v1276 = vpop.f32.mrb[0].mxu0
      %v1277 = vadd.f32 %v1169, %v1276
      %v1278 = vpop.f32.mrb[0].mxu0
      %1279 = vmatprep.mubr.f32.mxu0 0.0
      %1280 = vmatmul.mubr.f32.gmra.mrb[0].mxu0 %v1111
      %v1281 = vpop.f32.mrb[0].mxu0
      %v1282 = vadd.f32 %v1169, %v1281
      %v1283 = vpop.f32.mrb[0].mxu0
      %1284 = vmatprep.mubr.f32.mxu0 0.0
      %1285 = vmatmul.mubr.f32.gmra.mrb[0].mxu0 %v1112
      %v1286 = vpop.f32.mrb[0].mxu0
      %v1287 = vadd.f32 %v1169, %v1286
      %v1288 = vpop.f32.mrb[0].mxu0
      %1289 = vmatprep.mubr.f32.mxu0 0.0
      %1290 = vmatmul.mubr.f32.gmra.mrb[0].mxu0 %v1113
      %v1291 = vpop.f32.mrb[0].mxu0
      %v1292 = vadd.f32 %v1169, %v1291
      %v1293 = vpop.f32.mrb[0].mxu0
      %1294 = vmatprep.mubr.f32.mxu0 0.0
      %1295 = vmatmul.mubr.f32.gmra.mrb[0].mxu0 %v1114
      %v1296 = vpop.f32.mrb[0].mxu0
      %v1297 = vadd.f32 %v1169, %v1296
      %v1298 = vpop.f32.mrb[0].mxu0
      %1299 = vmatprep.mubr.f32.mxu0 0.0
      %1300 = vmatmul.mubr.f32.gmra.mrb[0].mxu0 %v1115
      %v1301 = vpop.f32.mrb[0].mxu0
      %v1302 = vadd.f32 %v1169, %v1301
      %v1303 = vpop.f32.mrb[0].mxu0
      %1304 = vmatprep.mubr.f32.mxu0 0.0
      %1305 = vmatmul.mubr.f32.gmra.mrb[0].mxu0 %v1116
      %v1306 = vpop.f32.mrb[0].mxu0
      %v1307 = vadd.f32 %v1169, %v1306
      %v1308 = vpop.f32.mrb[0].mxu0
      %1309 = vmatprep.mubr.f32.mxu0 0.0
      %1310 = vmatmul.mubr.f32.gmra.mrb[0].mxu0 %v1117
      %v1311 = vpop.f32.mrb[0].mxu0
      %v1312 = vadd.f32 %v1169, %v1311
      %v1313 = vpop.f32.mrb[0].mxu0
      %1314 = vmatprep.mubr.f32.mxu0 0.0
      %1315 = vmatmul.mubr.f32.gmra.mrb[0].mxu0 %v1118
      %v1316 = vpop.f32.mrb[0].mxu0
      %v1317 = vadd.f32 %v1169, %v1316
      %v1318 = vpop.f32.mrb[0].mxu0
      %1319 = vmatprep.mubr.f32.mxu0 0.0
      %1320 = vmatmul.mubr.f32.gmra.mrb[0].mxu0 %v1119
      %v1321 = vpop.f32.mrb[0].mxu0
      %v1322 = vadd.f32 %v1169, %v1321
      %v1323 = vpop.f32.mrb[0].mxu0
      %1324 = vmatprep.mubr.f32.mxu0 0.0
      %1325 = vmatmul.mubr.f32.gmra.mrb[0].mxu0 %v1120
      %v1326 = vpop.f32.mrb[0].mxu0
      %v1327 = vadd.f32 %v1169, %v1326
      %v1328 = vpop.f32.mrb[0].mxu0
      %1329 = vmatprep.mubr.f32.mxu0 0.0
      %1330 = vmatmul.mubr.f32.gmra.mrb[0].mxu0 %v1121
      %v1331 = vpop.f32.mrb[0].mxu0
      %v1332 = vadd.f32 %v1169, %v1331
      %v1333 = vpop.f32.mrb[0].mxu0
      %1334 = vmatprep.mubr.f32.mxu0 0.0
      %1335 = vmatmul.mubr.f32.gmra.mrb[0].mxu0 %v1122
      %v1336 = vpop.f32.mrb[0].mxu0
      %v1337 = vadd.f32 %v1169, %v1336
      %v1338 = vpop.f32.mrb[0].mxu0
      %1339 = vmatprep.mubr.f32.mxu0 0.0
      %1340 = vmatmul.mubr.f32.gmra.mrb[0].mxu0 %v1123
      %v1341 = vpop.f32.mrb[0].mxu0
      %v1342 = vadd.f32 %v1169, %v1341
      %v1343 = vpop.f32.mrb[0].mxu0
      %1344 = vmatprep.mubr.f32.mxu0 0.0
      %1345 = vmatmul.mubr.f32.gmra.mrb[0].mxu0 %v1124
      %v1346 = vpop.f32.mrb[0].mxu0
      %v1347 = vadd.f32 %v1169, %v1346
      %v1348 = vpop.f32.mrb[0].mxu0
      %1349 = vmatprep.mubr.f32.mxu0 0.0
      %1350 = vmatmul.mubr.f32.gmra.mrb[0].mxu0 %v1125
      %v1351 = vpop.f32.mrb[0].mxu0
      %v1352 = vadd.f32 %v1169, %v1351
      %v1353 = vpop.f32.mrb[0].mxu0
      %1354 = vmatprep.mubr.f32.mxu0 0.0
      %1355 = vmatmul.mubr.f32.gmra.mrb[0].mxu0 %v1126
      %v1356 = vpop.f32.mrb[0].mxu0
      %v1357 = vadd.f32 %v1169, %v1356
      %v1358 = vpop.f32.mrb[0].mxu0
      %1359 = vmatprep.mubr.f32.mxu0 0.0
      %1360 = vmatmul.mubr.f32.gmra.mrb[0].mxu0 %v1127
      %v1361 = vpop.f32.mrb[0].mxu0
      %v1362 = vadd.f32 %v1169, %v1361
      %v1363 = vpop.f32.mrb[0].mxu0
      %1364 = vmatprep.mubr.f32.mxu0 0.0
      %1365 = vmatmul.mubr.f32.gmra.mrb[0].mxu0 %v1128
      %v1366 = vpop.f32.mrb[0].mxu0
      %v1367 = vadd.f32 %v1169, %v1366
      %v1368 = vpop.f32.mrb[0].mxu0
      %1369 = vmatprep.mubr.f32.mxu0 0.0
      %1370 = vmatmul.mubr.f32.gmra.mrb[0].mxu0 %v1129
      %v1371 = vpop.f32.mrb[0].mxu0
      %v1372 = vadd.f32 %v1169, %v1371
      %v1373 = vpop.f32.mrb[0].mxu0
      %1374 = vmatprep.mubr.f32.mxu0 0.0
      %1375 = vmatmul.mubr.f32.gmra.mrb[0].mxu0 %v1130
      %v1376 = vpop.f32.mrb[0].mxu0
      %v1377 = vadd.f32 %v1169, %v1376
      %v1378 = vpop.f32.mrb[0].mxu0
      %1379 = vmatprep.mubr.f32.mxu0 0.0
      %1380 = vmatmul.mubr.f32.gmra.mrb[0].mxu0 %v1131
      %v1381 = vpop.f32.mrb[0].mxu0
      %v1382 = vadd.f32 %v1169, %v1381
      %v1383 = vpop.f32.mrb[0].mxu0
      %1384 = vmatprep.mubr.f32.mxu0 0.0
      %1385 = vmatmul.mubr.f32.gmra.mrb[0].mxu0 %v1132
      %v1386 = vpop.f32.mrb[0].mxu0
      %v1387 = vadd.f32 %v1169, %v1386
      %v1388 = vpop.f32.mrb[0].mxu0
      %1389 = vmatprep.mubr.f32.mxu0 0.0
      %1390 = vmatmul.mubr.f32.gmra.mrb[0].mxu0 %v1133
      %v1391 = vpop.f32.mrb[0].mxu0
      %v1392 = vadd.f32 %v1169, %v1391
      %v1393 = vpop.f32.mrb[0].mxu0
      %1394 = vmatprep.mubr.f32.mxu0 0.0
      %1395 = vmatmul.mubr.f32.gmra.mrb[0].mxu0 %v1134
      %v1396 = vpop.f32.mrb[0].mxu0
      %v1397 = vadd.f32 %v1169, %v1396
      %v1398 = vpop.f32.mrb[0].mxu0
      %1399 = vmatprep.mubr.f32.mxu0 0.0
      %1400 = vmatmul.mubr.f32.gmra.mrb[0].mxu0 %v1135
      %v1401 = vpop.f32.mrb[0].mxu0
      %v1402 = vadd.f32 %v1169, %v1401
      %v1403 = vpop.f32.mrb[0].mxu0
      %1404 = vmatprep.mubr.f32.mxu0 0.0
      %1405 = vmatmul.mubr.f32.gmra.mrb[0].mxu0 %v1136
      %v1406 = vpop.f32.mrb[0].mxu0
      %v1407 = vadd.f32 %v1169, %v1406
      %v1408 = vpop.f32.mrb[0].mxu0
      %1409 = vmatprep.mubr.f32.mxu0 0.0
      %1410 = vmatmul.mubr.f32.gmra.mrb[0].mxu0 %v1137
      %v1411 = vpop.f32.mrb[0].mxu0
      %v1412 = vadd.f32 %v1169, %v1411
      %v1413 = vpop.f32.mrb[0].mxu0
      %1414 = vmatprep.mubr.f32.mxu0 0.0
      %1415 = vmatmul.mubr.f32.gmra.mrb[0].mxu0 %v1138
      %v1416 = vpop.f32.mrb[0].mxu0
      %v1417 = vadd.f32 %v1169, %v1416
      %v1418 = vpop.f32.mrb[0].mxu0
      %1419 = vmatprep.mubr.f32.mxu0 0.0
      %1420 = vmatmul.mubr.f32.gmra.mrb[0].mxu0 %v1139
      %v1421 = vpop.f32.mrb[0].mxu0
      %v1422 = vadd.f32 %v1169, %v1421
      %v1423 = vpop.f32.mrb[0].mxu0
      %1424 = vmatprep.mubr.f32.mxu0 0.0
      %1425 = vmatmul.mubr.f32.gmra.mrb[0].mxu0 %v1140
      %v1426 = vpop.f32.mrb[0].mxu0
      %v1427 = vadd.f32 %v1169, %v1426
      %v1428 = vpop.f32.mrb[0].mxu0
      %1429 = vmatprep.mubr.f32.mxu0 0.0
      %1430 = vmatmul.mubr.f32.gmra.mrb[0].mxu0 %v1141
      %v1431 = vpop.f32.mrb[0].mxu0
      %v1432 = vadd.f32 %v1169, %v1431
      %v1433 = vpop.f32.mrb[0].mxu0
      %1434 = vmatprep.mubr.f32.mxu0 0.0
      %1435 = vmatmul.mubr.f32.gmra.mrb[0].mxu0 %v1142
      %v1436 = vpop.f32.mrb[0].mxu0
      %v1437 = vadd.f32 %v1169, %v1436
      %v1438 = vpop.f32.mrb[0].mxu0
      %1439 = vmatprep.mubr.f32.mxu0 0.0
      %1440 = vmatmul.mubr.f32.gmra.mrb[0].mxu0 %v1143
      %v1441 = vpop.f32.mrb[0].mxu0
      %v1442 = vadd.f32 %v1169, %v1441
      %v1443 = vpop.f32.mrb[0].mxu0
      %1444 = vmatprep.mubr.f32.mxu0 0.0
      %1445 = vmatmul.mubr.f32.gmra.mrb[0].mxu0 %v1144
      %v1446 = vpop.f32.mrb[0].mxu0
      %v1447 = vadd.f32 %v1169, %v1446
      %v1448 = vpop.f32.mrb[0].mxu0
      %1449 = vmatprep.mubr.f32.mxu0 0.0
      %1450 = vmatmul.mubr.f32.gmra.mrb[0].mxu0 %v1145
      %v1451 = vpop.f32.mrb[0].mxu0
      %v1452 = vadd.f32 %v1169, %v1451
      %v1453 = vpop.f32.mrb[0].mxu0
      %1454 = vmatprep.mubr.f32.mxu0 0.0
      %1455 = vmatmul.mubr.f32.gmra.mrb[0].mxu0 %v1146
      %v1456 = vpop.f32.mrb[0].mxu0
      %v1457 = vadd.f32 %v1169, %v1456
      %v1458 = vpop.f32.mrb[0].mxu0
      %1459 = vmatprep.mubr.f32.mxu0 0.0
      %1460 = vmatmul.mubr.f32.gmra.mrb[0].mxu0 %v1147
      %v1461 = vpop.f32.mrb[0].mxu0
      %v1462 = vadd.f32 %v1169, %v1461
      %v1463 = vpop.f32.mrb[0].mxu0
      %1464 = vmatprep.mubr.f32.mxu0 0.0
      %1465 = vmatmul.mubr.f32.gmra.mrb[0].mxu0 %v1148
      %v1466 = vpop.f32.mrb[0].mxu0
      %v1467 = vadd.f32 %v1169, %v1466
      %v1468 = vpop.f32.mrb[0].mxu0
      %1469 = vmatprep.mubr.f32.mxu0 0.0
      %1470 = vmatmul.mubr.f32.gmra.mrb[0].mxu0 %v1149
      %v1471 = vpop.f32.mrb[0].mxu0
      %v1472 = vadd.f32 %v1169, %v1471
      %v1473 = vpop.f32.mrb[0].mxu0
      %1474 = vmatprep.mubr.f32.mxu0 0.0
      %1475 = vmatmul.mubr.f32.gmra.mrb[0].mxu0 %v1150
      %v1476 = vpop.f32.mrb[0].mxu0
      %v1477 = vadd.f32 %v1169, %v1476
      %v1478 = vpop.f32.mrb[0].mxu0
      %1479 = vmatprep.mubr.f32.mxu0 0.0
      %1480 = vmatmul.mubr.f32.gmra.mrb[0].mxu0 %v1151
      %v1481 = vpop.f32.mrb[0].mxu0
      %v1482 = vadd.f32 %v1169, %v1481
      %v1483 = vpop.f32.mrb[0].mxu0
      %1484 = vmatprep.mubr.f32.mxu0 0.0
      %1485 = vmatmul.mubr.f32.gmra.mrb[0].mxu0 %v1152
      %v1486 = vpop.f32.mrb[0].mxu0
      %v1487 = vadd.f32 %v1169, %v1486
      %v1488 = vpop.f32.mrb[0].mxu0
      %1489 = vmatprep.mubr.f32.mxu0 0.0
      %1490 = vmatmul.mubr.f32.gmra.mrb[0].mxu0 %v1153
      %v1491 = vpop.f32.mrb[0].mxu0
      %v1492 = vadd.f32 %v1169, %v1491
      %v1493 = vpop.f32.mrb[0].mxu0
      %1494 = vmatprep.mubr.f32.mxu0 0.0
      %1495 = vmatmul.mubr.f32.gmra.mrb[0].mxu0 %v1154
      %v1496 = vpop.f32.mrb[0].mxu0
      %v1497 = vadd.f32 %v1169, %v1496
      %v1498 = vpop.f32.mrb[0].mxu0
      %1499 = vmatprep.mubr.f32.mxu0 0.0
      %1500 = vmatmul.mubr.f32.gmra.mrb[0].mxu0 %v1155
      %v1501 = vpop.f32.mrb[0].mxu0
      %v1502 = vadd.f32 %v1169, %v1501
      %v1503 = vpop.f32.mrb[0].mxu0
      %1504 = vmatprep.mubr.f32.mxu0 0.0
      %1505 = vmatmul.mubr.f32.gmra.mrb[0].mxu0 %v1156
      %v1506 = vpop.f32.mrb[0].mxu0
      %v1507 = vadd.f32 %v1169, %v1506
      %v1508 = vpop.f32.mrb[0].mxu0
      %1509 = vmatprep.mubr.f32.mxu0 0.0
      %1510 = vmatmul.mubr.f32.gmra.mrb[0].mxu0 %v1157
      %v1511 = vpop.f32.mrb[0].mxu0
      %v1512 = vadd.f32 %v1169, %v1511
      %v1513 = vpop.f32.mrb[0].mxu0
      %1514 = vmatprep.mubr.f32.mxu0 0.0
      %1515 = vmatmul.mubr.f32.gmra.mrb[0].mxu0 %v1158
      %v1516 = vpop.f32.mrb[0].mxu0
      %v1517 = vadd.f32 %v1169, %v1516
      %v1518 = vpop.f32.mrb[0].mxu0
      %1519 = vmatprep.mubr.f32.mxu0 0.0
      %1520 = vmatmul.mubr.f32.gmra.mrb[0].mxu0 %v1159
      %v1521 = vpop.f32.mrb[0].mxu0
      %v1522 = vadd.f32 %v1169, %v1521
      %v1523 = vpop.f32.mrb[0].mxu0
      %1524 = vmatprep.mubr.f32.mxu0 0.0
      %1525 = vmatmul.mubr.f32.gmra.mrb[0].mxu0 %v1160
      %v1526 = vpop.f32.mrb[0].mxu0
      %v1527 = vadd.f32 %v1169, %v1526
      %v1528 = vpop.f32.mrb[0].mxu0
      %1529 = vmatprep.mubr.f32.mxu0 0.0
      %1530 = vmatmul.mubr.f32.gmra.mrb[0].mxu0 %v1161
      %v1531 = vpop.f32.mrb[0].mxu0
      %v1532 = vadd.f32 %v1169, %v1531
      %v1533 = vpop.f32.mrb[0].mxu0
      %1534 = vmatprep.mubr.f32.mxu0 0.0
      %1535 = vmatmul.mubr.f32.gmra.mrb[0].mxu0 %v1162
      %v1536 = vpop.f32.mrb[0].mxu0
      %v1537 = vadd.f32 %v1169, %v1536
      %v1538 = vpop.f32.mrb[0].mxu0
      %1539 = vmatprep.mubr.f32.mxu0 0.0
      %1540 = vmatmul.mubr.f32.gmra.mrb[0].mxu0 %v1163
      %v1541 = vpop.f32.mrb[0].mxu0
      %v1542 = vadd.f32 %v1169, %v1541
      %v1543 = vpop.f32.mrb[0].mxu0
      %1544 = vmatprep.mubr.f32.mxu0 0.0
      %1545 = vmatmul.mubr.f32.gmra.mrb[0].mxu0 %v1164
      %v1546 = vpop.f32.mrb[0].mxu0
      %v1547 = vadd.f32 %v1169, %v1546
      %v1548 = vpop.f32.mrb[0].mxu0
      %1549 = vmatprep.mubr.f32.mxu0 0.0
      %1550 = vmatmul.mubr.f32.gmra.mrb[0].mxu0 %v1165
      %v1551 = vpop.f32.mrb[0].mxu0
      %v1552 = vadd.f32 %v1169, %v1551
      %v1553 = vpop.f32.mrb[0].mxu0
      %1554 = vdwg.mxu0
      %1555 = vst [vmem:[%s145] sm:$0xff] %v1237
      %1556 = vst [vmem:[%s145 + $0x8] sm:$0xff] %v1242
      %1557 = vst [vmem:[%s145 + $0x10] sm:$0xff] %v1247
      %1558 = vst [vmem:[%s145 + $0x18] sm:$0xff] %v1252
      %1559 = vst [vmem:[%s145 + $0x20] sm:$0xff] %v1257
      %1560 = vst [vmem:[%s145 + $0x28] sm:$0xff] %v1262
      %1561 = vst [vmem:[%s145 + $0x30] sm:$0xff] %v1267
      %1562 = vst [vmem:[%s145 + $0x38] sm:$0xff] %v1272
      %1563 = vst [vmem:[%s145 + $0x40] sm:$0xff] %v1277
      %1564 = vst [vmem:[%s145 + $0x48] sm:$0xff] %v1282
      %1565 = vst [vmem:[%s145 + $0x50] sm:$0xff] %v1287
      %1566 = vst [vmem:[%s145 + $0x58] sm:$0xff] %v1292
      %1567 = vst [vmem:[%s145 + $0x60] sm:$0xff] %v1297
      %1568 = vst [vmem:[%s145 + $0x68] sm:$0xff] %v1302
      %1569 = vst [vmem:[%s145 + $0x70] sm:$0xff] %v1307
      %1570 = vst [vmem:[%s145 + $0x78] sm:$0xff] %v1312
      %1571 = vst [vmem:[%s145 + $0x80] sm:$0xff] %v1317
      %1572 = vst [vmem:[%s145 + $0x88] sm:$0xff] %v1322
      %1573 = vst [vmem:[%s145 + $0x90] sm:$0xff] %v1327
      %1574 = vst [vmem:[%s145 + $0x98] sm:$0xff] %v1332
      %1575 = vst [vmem:[%s145 + $0xa0] sm:$0xff] %v1337
      %1576 = vst [vmem:[%s145 + $0xa8] sm:$0xff] %v1342
      %1577 = vst [vmem:[%s145 + $0xb0] sm:$0xff] %v1347
      %1578 = vst [vmem:[%s145 + $0xb8] sm:$0xff] %v1352
      %1579 = vst [vmem:[%s145 + $0xc0] sm:$0xff] %v1357
      %1580 = vst [vmem:[%s145 + $0xc8] sm:$0xff] %v1362
      %1581 = vst [vmem:[%s145 + $0xd0] sm:$0xff] %v1367
      %1582 = vst [vmem:[%s145 + $0xd8] sm:$0xff] %v1372
      %1583 = vst [vmem:[%s145 + $0xe0] sm:$0xff] %v1377
      %1584 = vst [vmem:[%s145 + $0xe8] sm:$0xff] %v1382
      %1585 = vst [vmem:[%s145 + $0xf0] sm:$0xff] %v1387
      %1586 = vst [vmem:[%s145 + $0xf8] sm:$0xff] %v1392
      %1587 = vst [vmem:[%s145 + $0x100] sm:$0xff] %v1397
      %1588 = vst [vmem:[%s145 + $0x108] sm:$0xff] %v1402
      %1589 = vst [vmem:[%s145 + $0x110] sm:$0xff] %v1407
      %1590 = vst [vmem:[%s145 + $0x118] sm:$0xff] %v1412
      %1591 = vst [vmem:[%s145 + $0x120] sm:$0xff] %v1417
      %1592 = vst [vmem:[%s145 + $0x128] sm:$0xff] %v1422
      %1593 = vst [vmem:[%s145 + $0x130] sm:$0xff] %v1427
      %1594 = vst [vmem:[%s145 + $0x138] sm:$0xff] %v1432
      %1595 = vst [vmem:[%s145 + $0x140] sm:$0xff] %v1437
      %1596 = vst [vmem:[%s145 + $0x148] sm:$0xff] %v1442
      %1597 = vst [vmem:[%s145 + $0x150] sm:$0xff] %v1447
      %1598 = vst [vmem:[%s145 + $0x158] sm:$0xff] %v1452
      %1599 = vst [vmem:[%s145 + $0x160] sm:$0xff] %v1457
      %1600 = vst [vmem:[%s145 + $0x168] sm:$0xff] %v1462
      %1601 = vst [vmem:[%s145 + $0x170] sm:$0xff] %v1467
      %1602 = vst [vmem:[%s145 + $0x178] sm:$0xff] %v1472
      %1603 = vst [vmem:[%s145 + $0x180] sm:$0xff] %v1477
      %1604 = vst [vmem:[%s145 + $0x188] sm:$0xff] %v1482
      %1605 = vst [vmem:[%s145 + $0x190] sm:$0xff] %v1487
      %1606 = vst [vmem:[%s145 + $0x198] sm:$0xff] %v1492
      %1607 = vst [vmem:[%s145 + $0x1a0] sm:$0xff] %v1497
      %1608 = vst [vmem:[%s145 + $0x1a8] sm:$0xff] %v1502
      %1609 = vst [vmem:[%s145 + $0x1b0] sm:$0xff] %v1507
      %1610 = vst [vmem:[%s145 + $0x1b8] sm:$0xff] %v1512
      %1611 = vst [vmem:[%s145 + $0x1c0] sm:$0xff] %v1517
      %1612 = vst [vmem:[%s145 + $0x1c8] sm:$0xff] %v1522
      %1613 = vst [vmem:[%s145 + $0x1d0] sm:$0xff] %v1527
      %1614 = vst [vmem:[%s145 + $0x1d8] sm:$0xff] %v1532
      %1615 = vst [vmem:[%s145 + $0x1e0] sm:$0xff] %v1537
      %1616 = vst [vmem:[%s145 + $0x1e8] sm:$0xff] %v1542
      %1617 = vst [vmem:[%s145 + $0x1f0] sm:$0xff] %v1547
      %1618 = vst [vmem:[%s145 + $0x1f8] sm:$0xff] %v1552
      %s1619 = smul.u32 64, %s13
      %p1620 = scmp.lt.s32.totalorder %s1619, 127
      %s1621 = scalar_select %p1620, %s1619, 127
      %s1622 = smul.addr %s1621, 8
      %s1623 = scalar_lea.vmem %s2, %s1622
      // Predicated region
      $region29: #{neural_arima_forward.1} parent=27 // pred_check
        %p1624 = pneg %p78
      $region30: #{neural_arima_forward.1} parent=27 // pred_check_branch
        %1626 = sbr.rel (%p1624) target = $region32
      $region31: #{neural_arima_forward.1} parent=27 // pred_region
        %s1627 = smul.u32 64, %s13
      $region32: #{neural_arima_forward.1} parent=27 // pred_fallthru
        _
    $region28: #{neural_arima_forward.1} parent=5 // pred_fallthru
      _
    %p1628 = scmp.le.s32.totalorder 2, %s8
    // Predicated region
    $region33: #{neural_arima_forward.1} parent=5 // pred_check
      %p1629 = pneg %p1628
    $region34: #{neural_arima_forward.1} parent=5 // pred_check_branch
      %1631 = sbr.rel (%p1629) target = $region36
    $region35: #{neural_arima_forward.1} parent=5 // pred_region
      %s1632 = ssub.s32 %s8, 2
      // Predicated region
      $region37: #{neural_arima_forward.1} parent=35 // pred_check
        %p1633 = pneg %p84
      $region38: #{neural_arima_forward.1} parent=35 // pred_check_branch
        %1635 = sbr.rel (%p1633) target = $region40
      $region39: #{neural_arima_forward.1} parent=35 // pred_region
        %s1636 = smul.u32 64, %s14
        %p1637 = scmp.lt.s32.totalorder %s1636, 127
        %s1638 = scalar_select %p1637, %s1636, 127
        %s1639 = smul.addr %s1638, 8
        %s1640 = scalar_lea.vmem %s2, %s1639
      $region40: #{neural_arima_forward.1} parent=35 // pred_fallthru
        _
    $region36: #{neural_arima_forward.1} parent=5 // pred_fallthru
      _
  $region6: #{neural_arima_forward.1} parent=0 // loop_footer
    %s12 = sadd.s32 1, %s8
  $region7: #{neural_arima_forward.1} parent=0 // loop_footer_branch
    %7 = sbr.rel target = $region3
  $region8: #{neural_arima_forward.1} parent=0 // loop_exit
    _

</llo_original>
